<compile_context>
chip_gen: v7x
topology: tpu7x:2x2x1
jax: 0.10.0
libtpu: 0.0.40
codegen_flags: <defaults>
</compile_context>

<pallas_src>
import functools

import jax
import jax.numpy as jnp
from jax.experimental import pallas as pl
from jax.experimental.pallas import tpu as pltpu

BN_EPS = 1e-5          # nn.BatchNorm2d default eps
LEAKY_SLOPE = 0.01     # torch.nn.LeakyReLU default negative_slope
VMEM_LIMIT = 32 * 1024 * 1024   # blocks here are only a few KiB


def _round_up(x, m):
    return (x + m - 1) // m * m


# ---------------------------------------------------------------------------
# In-kernel im2col on the flat "slab" layout.
#
# A slab holds one image, channel-padded and spatially zero-padded by 1,
# flattened to (C_pad, Hp*Wp) and placed at lane offset (Wp+1) inside a wider,
# zero-margined, 128-lane-aligned buffer.  With that offset every 3x3 tap is a
# *static* lane-shifted slice `slab[:, kh*Wp + kw : ... + width]`:
#   * width = L          -> output column j is the conv at flat position j
#   * width = S (slab)   -> output column q is the conv at flat position q-(Wp+1),
#                           i.e. the output is itself a slab (interior mask then
#                           zeroes margins/borders so it can feed the next conv).
# Taps at non-interior positions may read margin zeros; those outputs are always
# masked, so only the interior is ever required to be exact.
# ---------------------------------------------------------------------------
def _build_cols(slab32, Wp, width):
    taps = []
    for kh in range(3):
        for kw in range(3):
            s = kh * Wp + kw                    # static lane offset in [0, 2*Wp+2]
            taps.append(slab32[:, s:s + width])
    return jnp.concatenate(taps, axis=0)        # (9*C_pad, width), tap-major rows


def _stats1_kernel(x_ref, w1_ref, mask_ref, s_ref, ss_ref, *, Wp, width):
    """Pass A: block1 conv GEMM + masked single-pass sum / sum-of-squares,
    accumulated across the batch grid."""
    n = pl.program_id(0)
    x32 = x_ref[0].astype(jnp.float32)                                   # (C_in_pad, SX)
    cols = _build_cols(x32, Wp, width)                                   # (K1, S)
    y = jnp.dot(w1_ref[...], cols, preferred_element_type=jnp.float32)   # (C1, S)
    ym = y * mask_ref[...]                                               # zero non-interior

    @pl.when(n == 0)
    def _init():
        s_ref[...] = jnp.zeros_like(s_ref)
        ss_ref[...] = jnp.zeros_like(ss_ref)

    s_ref[...] += jnp.sum(ym, axis=1, keepdims=True)
    ss_ref[...] += jnp.sum(ym * ym, axis=1, keepdims=True)


def _apply1_stats2_kernel(x_ref, w1_ref, sc1_ref, sh1_ref, w2_ref,
                          mask_s_ref, mask_l_ref,
                          y1_ref, s_ref, ss_ref, *, Wp, S, L):
    """Pass B: block1 conv GEMM + folded BN affine + LeakyReLU, stored as the
    next slab (bf16).  Then block2's conv GEMM is run on that same (quantised)
    slab in VMEM to accumulate block2's batch statistics."""
    n = pl.program_id(0)
    x32 = x_ref[0].astype(jnp.float32)                                   # (C_in_pad, SX)

    # block1: full-slab-width output -> interior mask produces the zero margins.
    cols1 = _build_cols(x32, Wp, S)                                      # (K1, S)
    y = jnp.dot(w1_ref[...], cols1, preferred_element_type=jnp.float32)  # (C1, S)
    z = y * sc1_ref[...] + sh1_ref[...]
    z = jnp.where(z > 0, z, LEAKY_SLOPE * z)
    z = z * mask_s_ref[...]
    z_bf = z.astype(y1_ref.dtype)
    y1_ref[0] = z_bf                                                     # one aligned store

    # block2 statistics on exactly the values pass C will re-read (bf16-rounded).
    cols2 = _build_cols(z_bf.astype(jnp.float32), Wp, L)                 # (K2, L)
    y2 = jnp.dot(w2_ref[...], cols2, preferred_element_type=jnp.float32)
    ym = y2 * mask_l_ref[...]

    @pl.when(n == 0)
    def _init():
        s_ref[...] = jnp.zeros_like(s_ref)
        ss_ref[...] = jnp.zeros_like(ss_ref)

    s_ref[...] += jnp.sum(ym, axis=1, keepdims=True)
    ss_ref[...] += jnp.sum(ym * ym, axis=1, keepdims=True)


def _apply2_kernel(y1_ref, w2_ref, sc2_ref, sh2_ref, mask_l_ref, o_ref, *, Wp, L):
    """Pass C: block2 conv GEMM re-run on the stored slab + folded BN affine +
    LeakyReLU."""
    x32 = y1_ref[0].astype(jnp.float32)                                  # (C1, S)
    cols = _build_cols(x32, Wp, L)
    y = jnp.dot(w2_ref[...], cols, preferred_element_type=jnp.float32)
    z = y * sc2_ref[...] + sh2_ref[...]
    z = jnp.where(z > 0, z, LEAKY_SLOPE * z)
    o_ref[0] = (z * mask_l_ref[...]).astype(o_ref.dtype)


# -------------------------- wrapper-side glue (tiny) ------------------------
def _pack_weight(w, c_in_pad, c_out_pad):
    # PyTorch OIHW -> (C_out_pad, 9*C_in_pad), row order matches _build_cols
    o, i, _, _ = w.shape
    wp = jnp.pad(w, ((0, c_out_pad - o), (0, c_in_pad - i), (0, 0), (0, 0)))
    return wp.transpose(0, 2, 3, 1).reshape(c_out_pad, 9 * c_in_pad).astype(jnp.float32)


def _pad_vec(v, c_pad, fill):
    return jnp.pad(v.astype(jnp.float32), (0, c_pad - v.shape[0]), constant_values=fill)


def _to_input_slab(x, c_pad, off, s_total):
    # NCHW -> (N, C_pad, s_total) flat slab: padded image placed at lane `off`.
    n, c, h, w = x.shape
    hp, wp = h + 2, w + 2
    xp = jnp.pad(x, ((0, 0), (0, c_pad - c), (1, 1), (1, 1)))
    xf = xp.reshape(n, c_pad, hp * wp)
    return jnp.pad(xf, ((0, 0), (0, 0), (off, s_total - off - hp * wp)))


def _interior_mask(h, w, width, off):
    # (1, width) f32 mask: 1 exactly at lane off + (r*Wp + c) with r in [1,h], c in [1,w].
    hp, wp = h + 2, w + 2
    idx = jnp.arange(width) - off
    r, c = idx // wp, idx % wp
    m = (idx >= 0) & (idx < hp * wp) & (r >= 1) & (r <= h) & (c >= 1) & (c <= w)
    return m.astype(jnp.float32).reshape(1, width)


def _fold_bn(s, ss, gamma_p, beta_p, count):
    mean = s[:, 0] / count
    var = jnp.maximum(ss[:, 0] / count - mean * mean, 0.0)
    inv_std = jax.lax.rsqrt(var + BN_EPS)
    scale = (gamma_p * inv_std).reshape(-1, 1)
    shift = (beta_p - mean * gamma_p * inv_std).reshape(-1, 1)
    return scale, shift


def nlu_forward(x, params):
    """NLU.forward: y = block1(x); return cat([y, block2(y)], dim=1).
    Conv bias is dropped: training-mode BN subtracts the batch mean, so it cancels."""
    w1, _b1, g1, be1 = params["block1"]
    w2, _b2, g2, be2 = params["block2"]
    N, C_in, H, W = x.shape
    C_out = w1.shape[0]

    C_in_pad = _round_up(C_in, 8)
    C_out_pad = _round_up(C_out, 8)
    Hp, Wp = H + 2, W + 2
    L = Hp * Wp
    OFF = Wp + 1                          # image offset inside an activation slab
    S = _round_up(L + 2 * OFF, 128)       # activation slab width (lane-aligned)
    OFFX = 2 * OFF                        # image offset inside the input slab
    SX = _round_up(S + 2 * OFF, 128)      # input slab width (lane-aligned)
    K1 = 9 * C_in_pad
    K2 = 9 * C_out_pad

    wm1 = _pack_weight(w1, C_in_pad, C_out_pad)
    wm2 = _pack_weight(w2, C_out_pad, C_out_pad)
    g1p, be1p = _pad_vec(g1, C_out_pad, 1.0), _pad_vec(be1, C_out_pad, 0.0)
    g2p, be2p = _pad_vec(g2, C_out_pad, 1.0), _pad_vec(be2, C_out_pad, 0.0)
    mask_s = _interior_mask(H, W, S, OFF)
    mask_l = _interior_mask(H, W, L, 0)
    count = float(N * H * W)

    # Input slab, streamed through HBM as bf16 (math stays f32 in-kernel).
    xslab = _to_input_slab(x.astype(jnp.float32), C_in_pad, OFFX, SX).astype(jnp.bfloat16)

    # ---- Pass A: block1 batch statistics ------------------------------------
    s1, ss1 = pl.pallas_call(
        functools.partial(_stats1_kernel, Wp=Wp, width=S),
        out_shape=(jax.ShapeDtypeStruct((C_out_pad, 1), jnp.float32),
                   jax.ShapeDtypeStruct((C_out_pad, 1), jnp.float32)),
        grid_spec=pltpu.PrefetchScalarGridSpec(
            num_scalar_prefetch=0, grid=(N,),
            in_specs=[
                pl.BlockSpec((1, C_in_pad, SX), lambda n: (n, 0, 0)),
                pl.BlockSpec((C_out_pad, K1), lambda n: (0, 0)),
                pl.BlockSpec((1, S), lambda n: (0, 0)),
            ],
            out_specs=(
                pl.BlockSpec((C_out_pad, 1), lambda n: (0, 0)),
                pl.BlockSpec((C_out_pad, 1), lambda n: (0, 0)),
            ),
        ),
        compiler_params=pltpu.CompilerParams(
            dimension_semantics=("arbitrary",), vmem_limit_bytes=VMEM_LIMIT),
    )(xslab, wm1, mask_s)

    sc1, sh1 = _fold_bn(s1, ss1, g1p, be1p, count)

    # ---- Pass B: block1 apply (-> slab) + block2 statistics ------------------
    y1slab, s2, ss2 = pl.pallas_call(
        functools.partial(_apply1_stats2_kernel, Wp=Wp, S=S, L=L),
        out_shape=(jax.ShapeDtypeStruct((N, C_out_pad, S), jnp.bfloat16),
                   jax.ShapeDtypeStruct((C_out_pad, 1), jnp.float32),
                   jax.ShapeDtypeStruct((C_out_pad, 1), jnp.float32)),
        grid_spec=pltpu.PrefetchScalarGridSpec(
            num_scalar_prefetch=0, grid=(N,),
            in_specs=[
                pl.BlockSpec((1, C_in_pad, SX), lambda n: (n, 0, 0)),
                pl.BlockSpec((C_out_pad, K1), lambda n: (0, 0)),
                pl.BlockSpec((C_out_pad, 1), lambda n: (0, 0)),
                pl.BlockSpec((C_out_pad, 1), lambda n: (0, 0)),
                pl.BlockSpec((C_out_pad, K2), lambda n: (0, 0)),
                pl.BlockSpec((1, S), lambda n: (0, 0)),
                pl.BlockSpec((1, L), lambda n: (0, 0)),
            ],
            out_specs=(
                pl.BlockSpec((1, C_out_pad, S), lambda n: (n, 0, 0)),
                pl.BlockSpec((C_out_pad, 1), lambda n: (0, 0)),
                pl.BlockSpec((C_out_pad, 1), lambda n: (0, 0)),
            ),
        ),
        compiler_params=pltpu.CompilerParams(
            dimension_semantics=("arbitrary",), vmem_limit_bytes=VMEM_LIMIT),
    )(xslab, wm1, sc1, sh1, wm2, mask_s, mask_l)

    sc2, sh2 = _fold_bn(s2, ss2, g2p, be2p, count)

    # ---- Pass C: block2 apply -------------------------------------------------
    y2 = pl.pallas_call(
        functools.partial(_apply2_kernel, Wp=Wp, L=L),
        out_shape=jax.ShapeDtypeStruct((N, C_out_pad, L), jnp.float32),
        grid_spec=pltpu.PrefetchScalarGridSpec(
            num_scalar_prefetch=0, grid=(N,),
            in_specs=[
                pl.BlockSpec((1, C_out_pad, S), lambda n: (n, 0, 0)),
                pl.BlockSpec((C_out_pad, K2), lambda n: (0, 0)),
                pl.BlockSpec((C_out_pad, 1), lambda n: (0, 0)),
                pl.BlockSpec((C_out_pad, 1), lambda n: (0, 0)),
                pl.BlockSpec((1, L), lambda n: (0, 0)),
            ],
            out_specs=pl.BlockSpec((1, C_out_pad, L), lambda n: (n, 0, 0)),
        ),
        compiler_params=pltpu.CompilerParams(
            dimension_semantics=("parallel",), vmem_limit_bytes=VMEM_LIMIT),
    )(y1slab, wm2, sc2, sh2, mask_l)

    # ---- slice back to NCHW and concat ---------------------------------------
    y1 = (y1slab[:, :C_out, OFF:OFF + L].astype(jnp.float32)
          .reshape(N, C_out, Hp, Wp)[:, :, 1:1 + H, 1:1 + W])
    y2n = y2[:, :C_out, :].reshape(N, C_out, Hp, Wp)[:, :, 1:1 + H, 1:1 + W]
    return jnp.concatenate([y1, y2n], axis=1)


# ---------------- pure-JAX references (for sanity checks) -------------------
def _dba_ref(x, w, b, gamma, beta):
    y = jax.lax.conv_general_dilated(
        x, w, window_strides=(1, 1), padding="SAME",
        dimension_numbers=("NCHW", "OIHW", "NCHW"))
    y = y + b[None, :, None, None]
    mean = jnp.mean(y, axis=(0, 2, 3), keepdims=True)
    var = jnp.mean((y - mean) ** 2, axis=(0, 2, 3), keepdims=True)
    z = (y - mean) / jnp.sqrt(var + BN_EPS)
    z = z * gamma[None, :, None, None] + beta[None, :, None, None]
    return jnp.where(z > 0, z, LEAKY_SLOPE * z)


def _nlu_ref(x, params):
    y = _dba_ref(x, *params["block1"])
    return jnp.concatenate([y, _dba_ref(y, *params["block2"])], axis=1)


def _nlu_ref_quantized(x, params):
    # Same math, but quantizing the streamed activations to bf16 exactly where
    # the Pallas path does (input slab and block1's stored slab), isolating
    # kernel error from the deliberate bf16 activation storage.
    xq = x.astype(jnp.bfloat16).astype(jnp.float32)
    y = _dba_ref(xq, *params["block1"])
    yq = y.astype(jnp.bfloat16).astype(jnp.float32)
    return jnp.concatenate([yq, _dba_ref(yq, *params["block2"])], axis=1)


if __name__ == "__main__":
    # Small shapes consistent with NLU: inp_size=8 -> out_size=4, output channels = 8.
    N, C_IN, H, W = 2, 8, 16, 16
    C_OUT = C_IN // 2

    key = jax.random.PRNGKey(0)
    ks = jax.random.split(key, 9)
    params = {
        "block1": (
            0.1 * jax.random.normal(ks[0], (C_OUT, C_IN, 3, 3), jnp.float32),
            0.1 * jax.random.normal(ks[1], (C_OUT,), jnp.float32),
            1.0 + 0.1 * jax.random.normal(ks[2], (C_OUT,), jnp.float32),
            0.1 * jax.random.normal(ks[3], (C_OUT,), jnp.float32),
        ),
        "block2": (
            0.1 * jax.random.normal(ks[4], (C_OUT, C_OUT, 3, 3), jnp.float32),
            0.1 * jax.random.normal(ks[5], (C_OUT,), jnp.float32),
            1.0 + 0.1 * jax.random.normal(ks[6], (C_OUT,), jnp.float32),
            0.1 * jax.random.normal(ks[7], (C_OUT,), jnp.float32),
        ),
    }
    x = jax.random.normal(ks[8], (N, C_IN, H, W), jnp.float32)

    out = jax.block_until_ready(jax.jit(nlu_forward)(x, params))
    assert out.shape == (N, 2 * C_OUT, H, W), out.shape

    # Check vs a reference fed the same bf16-quantized activation streams
    # (isolates pure kernel error: GEMM accumulation order + single-pass variance).
    ref_q = jax.block_until_ready(_nlu_ref_quantized(x, params))
    err_q = float(jnp.max(jnp.abs(out - ref_q)))
    assert jnp.allclose(out, ref_q, atol=2e-2, rtol=2e-2), err_q

    # Coarse sanity check vs the pure-f32 reference: bounds the deliberate
    # bf16-activation-storage error.
    ref = jax.block_until_ready(_nlu_ref(x, params))
    err = float(jnp.max(jnp.abs(out - ref)))
    assert jnp.allclose(out, ref, atol=1e-1, rtol=1e-1), err

    print("KERNEL_OK")
</pallas_src>

<mosaic_0001>
module attributes {stable_mosaic.version = 11 : i64} {
  func.func @_stats1_kernel(%arg0: i32, %arg1: memref<1x8x512xbf16, #tpu.memory_space<vmem>>, %arg2: memref<8x72xf32, #tpu.memory_space<vmem>>, %arg3: memref<1x384xf32, #tpu.memory_space<vmem>>, %arg4: memref<8x1xf32, #tpu.memory_space<vmem>>, %arg5: memref<8x1xf32, #tpu.memory_space<vmem>>) attributes {dimension_semantics = [#tpu.dimension_semantics<arbitrary>], iteration_bounds = array<i64: 2>, scalar_prefetch = 0 : i64, scratch_operands = 0 : i64, tpu.core_type = #tpu.core_type<tc>, window_params = [{transform_indices = @transform_0, window_bounds = array<i64: 1, 8, 512>}, {pipeline_mode = #tpu.pipeline_mode<synchronous>, transform_indices = @transform_1, window_bounds = array<i64: 8, 72>}, {pipeline_mode = #tpu.pipeline_mode<synchronous>, transform_indices = @transform_2, window_bounds = array<i64: 1, 384>}, {pipeline_mode = #tpu.pipeline_mode<synchronous>, transform_indices = @transform_3, window_bounds = array<i64: 8, 1>}, {pipeline_mode = #tpu.pipeline_mode<synchronous>, transform_indices = @transform_4, window_bounds = array<i64: 8, 1>}]} {
    %c0 = arith.constant 0 : index
    %c0_0 = arith.constant 0 : index
    %c0_1 = arith.constant 0 : index
    %0 = vector.load %arg1[%c0, %c0_0, %c0_1] : memref<1x8x512xbf16, #tpu.memory_space<vmem>>, vector<1x8x512xbf16>
    %1 = vector.shape_cast %0 : vector<1x8x512xbf16> to vector<8x512xbf16>
    %2 = arith.extf %1 : vector<8x512xbf16> to vector<8x512xf32>
    %3 = vector.extract_strided_slice %2 {offsets = [0, 0], sizes = [8, 384], strides = [1, 1]} : vector<8x512xf32> to vector<8x384xf32>
    %4 = vector.extract_strided_slice %2 {offsets = [0, 1], sizes = [8, 384], strides = [1, 1]} : vector<8x512xf32> to vector<8x384xf32>
    %5 = vector.extract_strided_slice %2 {offsets = [0, 2], sizes = [8, 384], strides = [1, 1]} : vector<8x512xf32> to vector<8x384xf32>
    %6 = vector.extract_strided_slice %2 {offsets = [0, 18], sizes = [8, 384], strides = [1, 1]} : vector<8x512xf32> to vector<8x384xf32>
    %7 = vector.extract_strided_slice %2 {offsets = [0, 19], sizes = [8, 384], strides = [1, 1]} : vector<8x512xf32> to vector<8x384xf32>
    %8 = vector.extract_strided_slice %2 {offsets = [0, 20], sizes = [8, 384], strides = [1, 1]} : vector<8x512xf32> to vector<8x384xf32>
    %9 = vector.extract_strided_slice %2 {offsets = [0, 36], sizes = [8, 384], strides = [1, 1]} : vector<8x512xf32> to vector<8x384xf32>
    %10 = vector.extract_strided_slice %2 {offsets = [0, 37], sizes = [8, 384], strides = [1, 1]} : vector<8x512xf32> to vector<8x384xf32>
    %11 = vector.extract_strided_slice %2 {offsets = [0, 38], sizes = [8, 384], strides = [1, 1]} : vector<8x512xf32> to vector<8x384xf32>
    %12 = tpu.concatenate %3, %4, %5, %6, %7, %8, %9, %10, %11 in 0 : vector<8x384xf32>, vector<8x384xf32>, vector<8x384xf32>, vector<8x384xf32>, vector<8x384xf32>, vector<8x384xf32>, vector<8x384xf32>, vector<8x384xf32>, vector<8x384xf32> -> vector<72x384xf32>
    %c0_2 = arith.constant 0 : index
    %c0_3 = arith.constant 0 : index
    %13 = vector.load %arg2[%c0_2, %c0_3] : memref<8x72xf32, #tpu.memory_space<vmem>>, vector<8x72xf32>
    %cst = arith.constant dense<0.000000e+00> : vector<8x384xf32>
    %14 = tpu.matmul %13, %12, %cst {dimension_numbers = #tpu.dot_dimension_numbers<[1], [0], [0], [1], [0, 0, 1, 1], [], []>} : vector<8x72xf32>, vector<72x384xf32>, vector<8x384xf32> -> vector<8x384xf32>
    %c0_4 = arith.constant 0 : index
    %c0_5 = arith.constant 0 : index
    %15 = vector.load %arg3[%c0_4, %c0_5] : memref<1x384xf32, #tpu.memory_space<vmem>>, vector<1x384xf32>
    %16 = vector.broadcast %15 : vector<1x384xf32> to vector<8x384xf32>
    %17 = arith.mulf %14, %16 : vector<8x384xf32>
    %c0_i32 = arith.constant 0 : i32
    %18 = arith.cmpi eq, %arg0, %c0_i32 : i32
    %19 = arith.extui %18 : i1 to i32
    %c0_i32_6 = arith.constant 0 : i32
    %20 = arith.cmpi ne, %19, %c0_i32_6 : i32
    scf.if %20 {
      %cst_17 = arith.constant 0.000000e+00 : f32
      %32 = vector.broadcast %cst_17 : f32 to vector<8x1xf32>
      %c0_18 = arith.constant 0 : index
      %c0_19 = arith.constant 0 : index
      %33 = vector.load %arg4[%c0_18, %c0_19] : memref<8x1xf32, #tpu.memory_space<vmem>>, vector<8x1xf32>
      tpu.vector_store %arg4[%c0_18, %c0_19], %32 {strides = array<i32>} : memref<8x1xf32, #tpu.memory_space<vmem>>, vector<8x1xf32>,
      %cst_20 = arith.constant 0.000000e+00 : f32
      %34 = vector.broadcast %cst_20 : f32 to vector<8x1xf32>
      %c0_21 = arith.constant 0 : index
      %c0_22 = arith.constant 0 : index
      %35 = vector.load %arg5[%c0_21, %c0_22] : memref<8x1xf32, #tpu.memory_space<vmem>>, vector<8x1xf32>
      tpu.vector_store %arg5[%c0_21, %c0_22], %34 {strides = array<i32>} : memref<8x1xf32, #tpu.memory_space<vmem>>, vector<8x1xf32>,
    } else {
    }
    %c0_7 = arith.constant 0 : index
    %c0_8 = arith.constant 0 : index
    %21 = vector.load %arg4[%c0_7, %c0_8] : memref<8x1xf32, #tpu.memory_space<vmem>>, vector<8x1xf32>
    %cst_9 = arith.constant dense<0.000000e+00> : vector<8xf32>
    %22 = vector.multi_reduction <add>, %17, %cst_9 [1] : vector<8x384xf32> to vector<8xf32>
    %23 = vector.shape_cast %22 : vector<8xf32> to vector<8x1xf32>
    %24 = arith.addf %21, %23 : vector<8x1xf32>
    %c0_10 = arith.constant 0 : index
    %c0_11 = arith.constant 0 : index
    %25 = vector.load %arg4[%c0_10, %c0_11] : memref<8x1xf32, #tpu.memory_space<vmem>>, vector<8x1xf32>
    tpu.vector_store %arg4[%c0_10, %c0_11], %24 {strides = array<i32>} : memref<8x1xf32, #tpu.memory_space<vmem>>, vector<8x1xf32>,
    %c0_12 = arith.constant 0 : index
    %c0_13 = arith.constant 0 : index
    %26 = vector.load %arg5[%c0_12, %c0_13] : memref<8x1xf32, #tpu.memory_space<vmem>>, vector<8x1xf32>
    %27 = arith.mulf %17, %17 : vector<8x384xf32>
    %cst_14 = arith.constant dense<0.000000e+00> : vector<8xf32>
    %28 = vector.multi_reduction <add>, %27, %cst_14 [1] : vector<8x384xf32> to vector<8xf32>
    %29 = vector.shape_cast %28 : vector<8xf32> to vector<8x1xf32>
    %30 = arith.addf %26, %29 : vector<8x1xf32>
    %c0_15 = arith.constant 0 : index
    %c0_16 = arith.constant 0 : index
    %31 = vector.load %arg5[%c0_15, %c0_16] : memref<8x1xf32, #tpu.memory_space<vmem>>, vector<8x1xf32>
    tpu.vector_store %arg5[%c0_15, %c0_16], %30 {strides = array<i32>} : memref<8x1xf32, #tpu.memory_space<vmem>>, vector<8x1xf32>,
    return
  }
  func.func @transform_0(%arg0: i32) -> (i32, i32, i32) {
    %c0_i32 = arith.constant 0 : i32
    %c0_i32_0 = arith.constant 0 : i32
    %c0_i32_1 = arith.constant 0 : i32
    return %arg0, %c0_i32, %c0_i32_0 : i32, i32, i32
  }
  func.func @transform_1(%arg0: i32) -> (i32, i32) {
    %c0_i32 = arith.constant 0 : i32
    %c0_i32_0 = arith.constant 0 : i32
    %c0_i32_1 = arith.constant 0 : i32
    return %c0_i32, %c0_i32_0 : i32, i32
  }
  func.func @transform_2(%arg0: i32) -> (i32, i32) {
    %c0_i32 = arith.constant 0 : i32
    %c0_i32_0 = arith.constant 0 : i32
    %c0_i32_1 = arith.constant 0 : i32
    return %c0_i32, %c0_i32_0 : i32, i32
  }
  func.func @transform_3(%arg0: i32) -> (i32, i32) {
    %c0_i32 = arith.constant 0 : i32
    %c0_i32_0 = arith.constant 0 : i32
    %c0_i32_1 = arith.constant 0 : i32
    return %c0_i32, %c0_i32_0 : i32, i32
  }
  func.func @transform_4(%arg0: i32) -> (i32, i32) {
    %c0_i32 = arith.constant 0 : i32
    %c0_i32_0 = arith.constant 0 : i32
    %c0_i32_1 = arith.constant 0 : i32
    return %c0_i32, %c0_i32_0 : i32, i32
  }
}

module attributes {stable_mosaic.version = 11 : i64} {
  func.func @_apply1_stats2_kernel(%arg0: i32, %arg1: memref<1x8x512xbf16, #tpu.memory_space<vmem>>, %arg2: memref<8x72xf32, #tpu.memory_space<vmem>>, %arg3: memref<8x1xf32, #tpu.memory_space<vmem>>, %arg4: memref<8x1xf32, #tpu.memory_space<vmem>>, %arg5: memref<8x72xf32, #tpu.memory_space<vmem>>, %arg6: memref<1x384xf32, #tpu.memory_space<vmem>>, %arg7: memref<1x324xf32, #tpu.memory_space<vmem>>, %arg8: memref<1x8x384xbf16, #tpu.memory_space<vmem>>, %arg9: memref<8x1xf32, #tpu.memory_space<vmem>>, %arg10: memref<8x1xf32, #tpu.memory_space<vmem>>) attributes {dimension_semantics = [#tpu.dimension_semantics<arbitrary>], iteration_bounds = array<i64: 2>, scalar_prefetch = 0 : i64, scratch_operands = 0 : i64, tpu.core_type = #tpu.core_type<tc>, window_params = [{transform_indices = @transform_0, window_bounds = array<i64: 1, 8, 512>}, {pipeline_mode = #tpu.pipeline_mode<synchronous>, transform_indices = @transform_1, window_bounds = array<i64: 8, 72>}, {pipeline_mode = #tpu.pipeline_mode<synchronous>, transform_indices = @transform_2, window_bounds = array<i64: 8, 1>}, {pipeline_mode = #tpu.pipeline_mode<synchronous>, transform_indices = @transform_3, window_bounds = array<i64: 8, 1>}, {pipeline_mode = #tpu.pipeline_mode<synchronous>, transform_indices = @transform_4, window_bounds = array<i64: 8, 72>}, {pipeline_mode = #tpu.pipeline_mode<synchronous>, transform_indices = @transform_5, window_bounds = array<i64: 1, 384>}, {pipeline_mode = #tpu.pipeline_mode<synchronous>, transform_indices = @transform_6, window_bounds = array<i64: 1, 324>}, {transform_indices = @transform_7, window_bounds = array<i64: 1, 8, 384>}, {pipeline_mode = #tpu.pipeline_mode<synchronous>, transform_indices = @transform_8, window_bounds = array<i64: 8, 1>}, {pipeline_mode = #tpu.pipeline_mode<synchronous>, transform_indices = @transform_9, window_bounds = array<i64: 8, 1>}]} {
    %c0 = arith.constant 0 : index
    %c0_0 = arith.constant 0 : index
    %c0_1 = arith.constant 0 : index
    %0 = vector.load %arg1[%c0, %c0_0, %c0_1] : memref<1x8x512xbf16, #tpu.memory_space<vmem>>, vector<1x8x512xbf16>
    %1 = vector.shape_cast %0 : vector<1x8x512xbf16> to vector<8x512xbf16>
    %2 = arith.extf %1 : vector<8x512xbf16> to vector<8x512xf32>
    %3 = vector.extract_strided_slice %2 {offsets = [0, 0], sizes = [8, 384], strides = [1, 1]} : vector<8x512xf32> to vector<8x384xf32>
    %4 = vector.extract_strided_slice %2 {offsets = [0, 1], sizes = [8, 384], strides = [1, 1]} : vector<8x512xf32> to vector<8x384xf32>
    %5 = vector.extract_strided_slice %2 {offsets = [0, 2], sizes = [8, 384], strides = [1, 1]} : vector<8x512xf32> to vector<8x384xf32>
    %6 = vector.extract_strided_slice %2 {offsets = [0, 18], sizes = [8, 384], strides = [1, 1]} : vector<8x512xf32> to vector<8x384xf32>
    %7 = vector.extract_strided_slice %2 {offsets = [0, 19], sizes = [8, 384], strides = [1, 1]} : vector<8x512xf32> to vector<8x384xf32>
    %8 = vector.extract_strided_slice %2 {offsets = [0, 20], sizes = [8, 384], strides = [1, 1]} : vector<8x512xf32> to vector<8x384xf32>
    %9 = vector.extract_strided_slice %2 {offsets = [0, 36], sizes = [8, 384], strides = [1, 1]} : vector<8x512xf32> to vector<8x384xf32>
    %10 = vector.extract_strided_slice %2 {offsets = [0, 37], sizes = [8, 384], strides = [1, 1]} : vector<8x512xf32> to vector<8x384xf32>
    %11 = vector.extract_strided_slice %2 {offsets = [0, 38], sizes = [8, 384], strides = [1, 1]} : vector<8x512xf32> to vector<8x384xf32>
    %12 = tpu.concatenate %3, %4, %5, %6, %7, %8, %9, %10, %11 in 0 : vector<8x384xf32>, vector<8x384xf32>, vector<8x384xf32>, vector<8x384xf32>, vector<8x384xf32>, vector<8x384xf32>, vector<8x384xf32>, vector<8x384xf32>, vector<8x384xf32> -> vector<72x384xf32>
    %c0_2 = arith.constant 0 : index
    %c0_3 = arith.constant 0 : index
    %13 = vector.load %arg2[%c0_2, %c0_3] : memref<8x72xf32, #tpu.memory_space<vmem>>, vector<8x72xf32>
    %cst = arith.constant dense<0.000000e+00> : vector<8x384xf32>
    %14 = tpu.matmul %13, %12, %cst {dimension_numbers = #tpu.dot_dimension_numbers<[1], [0], [0], [1], [0, 0, 1, 1], [], []>} : vector<8x72xf32>, vector<72x384xf32>, vector<8x384xf32> -> vector<8x384xf32>
    %c0_4 = arith.constant 0 : index
    %c0_5 = arith.constant 0 : index
    %15 = vector.load %arg3[%c0_4, %c0_5] : memref<8x1xf32, #tpu.memory_space<vmem>>, vector<8x1xf32>
    %16 = vector.broadcast %15 : vector<8x1xf32> to vector<8x384xf32>
    %17 = arith.mulf %14, %16 : vector<8x384xf32>
    %c0_6 = arith.constant 0 : index
    %c0_7 = arith.constant 0 : index
    %18 = vector.load %arg4[%c0_6, %c0_7] : memref<8x1xf32, #tpu.memory_space<vmem>>, vector<8x1xf32>
    %19 = vector.broadcast %18 : vector<8x1xf32> to vector<8x384xf32>
    %20 = arith.addf %17, %19 : vector<8x384xf32>
    %cst_8 = arith.constant 0.000000e+00 : f32
    %21 = vector.broadcast %cst_8 : f32 to vector<8x384xf32>
    %22 = arith.cmpf ogt, %20, %21 : vector<8x384xf32>
    %cst_9 = arith.constant 0.00999999977 : f32
    %23 = vector.broadcast %cst_9 : f32 to vector<8x384xf32>
    %24 = arith.mulf %23, %20 : vector<8x384xf32>
    %25 = arith.select %22, %20, %24 : vector<8x384xi1>, vector<8x384xf32>
    %c0_10 = arith.constant 0 : index
    %c0_11 = arith.constant 0 : index
    %26 = vector.load %arg6[%c0_10, %c0_11] : memref<1x384xf32, #tpu.memory_space<vmem>>, vector<1x384xf32>
    %27 = vector.broadcast %26 : vector<1x384xf32> to vector<8x384xf32>
    %28 = arith.mulf %25, %27 : vector<8x384xf32>
    %29 = arith.truncf %28 : vector<8x384xf32> to vector<8x384xbf16>
    %c0_12 = arith.constant 0 : index
    %c0_13 = arith.constant 0 : index
    %c0_14 = arith.constant 0 : index
    %30 = vector.load %arg8[%c0_12, %c0_13, %c0_14] : memref<1x8x384xbf16, #tpu.memory_space<vmem>>, vector<1x8x384xbf16>
    %31 = vector.shape_cast %30 : vector<1x8x384xbf16> to vector<8x384xbf16>
    %32 = vector.shape_cast %29 : vector<8x384xbf16> to vector<1x8x384xbf16>
    tpu.vector_store %arg8[%c0_12, %c0_13, %c0_14], %32 {strides = array<i32>} : memref<1x8x384xbf16, #tpu.memory_space<vmem>>, vector<1x8x384xbf16>,
    %33 = arith.extf %29 : vector<8x384xbf16> to vector<8x384xf32>
    %34 = vector.extract_strided_slice %33 {offsets = [0, 0], sizes = [8, 324], strides = [1, 1]} : vector<8x384xf32> to vector<8x324xf32>
    %35 = vector.extract_strided_slice %33 {offsets = [0, 1], sizes = [8, 324], strides = [1, 1]} : vector<8x384xf32> to vector<8x324xf32>
    %36 = vector.extract_strided_slice %33 {offsets = [0, 2], sizes = [8, 324], strides = [1, 1]} : vector<8x384xf32> to vector<8x324xf32>
    %37 = vector.extract_strided_slice %33 {offsets = [0, 18], sizes = [8, 324], strides = [1, 1]} : vector<8x384xf32> to vector<8x324xf32>
    %38 = vector.extract_strided_slice %33 {offsets = [0, 19], sizes = [8, 324], strides = [1, 1]} : vector<8x384xf32> to vector<8x324xf32>
    %39 = vector.extract_strided_slice %33 {offsets = [0, 20], sizes = [8, 324], strides = [1, 1]} : vector<8x384xf32> to vector<8x324xf32>
    %40 = vector.extract_strided_slice %33 {offsets = [0, 36], sizes = [8, 324], strides = [1, 1]} : vector<8x384xf32> to vector<8x324xf32>
    %41 = vector.extract_strided_slice %33 {offsets = [0, 37], sizes = [8, 324], strides = [1, 1]} : vector<8x384xf32> to vector<8x324xf32>
    %42 = vector.extract_strided_slice %33 {offsets = [0, 38], sizes = [8, 324], strides = [1, 1]} : vector<8x384xf32> to vector<8x324xf32>
    %43 = tpu.concatenate %34, %35, %36, %37, %38, %39, %40, %41, %42 in 0 : vector<8x324xf32>, vector<8x324xf32>, vector<8x324xf32>, vector<8x324xf32>, vector<8x324xf32>, vector<8x324xf32>, vector<8x324xf32>, vector<8x324xf32>, vector<8x324xf32> -> vector<72x324xf32>
    %c0_15 = arith.constant 0 : index
    %c0_16 = arith.constant 0 : index
    %44 = vector.load %arg5[%c0_15, %c0_16] : memref<8x72xf32, #tpu.memory_space<vmem>>, vector<8x72xf32>
    %cst_17 = arith.constant dense<0.000000e+00> : vector<8x324xf32>
    %45 = tpu.matmul %44, %43, %cst_17 {dimension_numbers = #tpu.dot_dimension_numbers<[1], [0], [0], [1], [0, 0, 1, 1], [], []>} : vector<8x72xf32>, vector<72x324xf32>, vector<8x324xf32> -> vector<8x324xf32>
    %c0_18 = arith.constant 0 : index
    %c0_19 = arith.constant 0 : index
    %46 = vector.load %arg7[%c0_18, %c0_19] : memref<1x324xf32, #tpu.memory_space<vmem>>, vector<1x324xf32>
    %47 = vector.broadcast %46 : vector<1x324xf32> to vector<8x324xf32>
    %48 = arith.mulf %45, %47 : vector<8x324xf32>
    %c0_i32 = arith.constant 0 : i32
    %49 = arith.cmpi eq, %arg0, %c0_i32 : i32
    %50 = arith.extui %49 : i1 to i32
    %c0_i32_20 = arith.constant 0 : i32
    %51 = arith.cmpi ne, %50, %c0_i32_20 : i32
    scf.if %51 {
      %cst_31 = arith.constant 0.000000e+00 : f32
      %63 = vector.broadcast %cst_31 : f32 to vector<8x1xf32>
      %c0_32 = arith.constant 0 : index
      %c0_33 = arith.constant 0 : index
      %64 = vector.load %arg9[%c0_32, %c0_33] : memref<8x1xf32, #tpu.memory_space<vmem>>, vector<8x1xf32>
      tpu.vector_store %arg9[%c0_32, %c0_33], %63 {strides = array<i32>} : memref<8x1xf32, #tpu.memory_space<vmem>>, vector<8x1xf32>,
      %cst_34 = arith.constant 0.000000e+00 : f32
      %65 = vector.broadcast %cst_34 : f32 to vector<8x1xf32>
      %c0_35 = arith.constant 0 : index
      %c0_36 = arith.constant 0 : index
      %66 = vector.load %arg10[%c0_35, %c0_36] : memref<8x1xf32, #tpu.memory_space<vmem>>, vector<8x1xf32>
      tpu.vector_store %arg10[%c0_35, %c0_36], %65 {strides = array<i32>} : memref<8x1xf32, #tpu.memory_space<vmem>>, vector<8x1xf32>,
    } else {
    }
    %c0_21 = arith.constant 0 : index
    %c0_22 = arith.constant 0 : index
    %52 = vector.load %arg9[%c0_21, %c0_22] : memref<8x1xf32, #tpu.memory_space<vmem>>, vector<8x1xf32>
    %cst_23 = arith.constant dense<0.000000e+00> : vector<8xf32>
    %53 = vector.multi_reduction <add>, %48, %cst_23 [1] : vector<8x324xf32> to vector<8xf32>
    %54 = vector.shape_cast %53 : vector<8xf32> to vector<8x1xf32>
    %55 = arith.addf %52, %54 : vector<8x1xf32>
    %c0_24 = arith.constant 0 : index
    %c0_25 = arith.constant 0 : index
    %56 = vector.load %arg9[%c0_24, %c0_25] : memref<8x1xf32, #tpu.memory_space<vmem>>, vector<8x1xf32>
    tpu.vector_store %arg9[%c0_24, %c0_25], %55 {strides = array<i32>} : memref<8x1xf32, #tpu.memory_space<vmem>>, vector<8x1xf32>,
    %c0_26 = arith.constant 0 : index
    %c0_27 = arith.constant 0 : index
    %57 = vector.load %arg10[%c0_26, %c0_27] : memref<8x1xf32, #tpu.memory_space<vmem>>, vector<8x1xf32>
    %58 = arith.mulf %48, %48 : vector<8x324xf32>
    %cst_28 = arith.constant dense<0.000000e+00> : vector<8xf32>
    %59 = vector.multi_reduction <add>, %58, %cst_28 [1] : vector<8x324xf32> to vector<8xf32>
    %60 = vector.shape_cast %59 : vector<8xf32> to vector<8x1xf32>
    %61 = arith.addf %57, %60 : vector<8x1xf32>
    %c0_29 = arith.constant 0 : index
    %c0_30 = arith.constant 0 : index
    %62 = vector.load %arg10[%c0_29, %c0_30] : memref<8x1xf32, #tpu.memory_space<vmem>>, vector<8x1xf32>
    tpu.vector_store %arg10[%c0_29, %c0_30], %61 {strides = array<i32>} : memref<8x1xf32, #tpu.memory_space<vmem>>, vector<8x1xf32>,
    return
  }
  func.func @transform_0(%arg0: i32) -> (i32, i32, i32) {
    %c0_i32 = arith.constant 0 : i32
    %c0_i32_0 = arith.constant 0 : i32
    %c0_i32_1 = arith.constant 0 : i32
    return %arg0, %c0_i32, %c0_i32_0 : i32, i32, i32
  }
  func.func @transform_1(%arg0: i32) -> (i32, i32) {
    %c0_i32 = arith.constant 0 : i32
    %c0_i32_0 = arith.constant 0 : i32
    %c0_i32_1 = arith.constant 0 : i32
    return %c0_i32, %c0_i32_0 : i32, i32
  }
  func.func @transform_2(%arg0: i32) -> (i32, i32) {
    %c0_i32 = arith.constant 0 : i32
    %c0_i32_0 = arith.constant 0 : i32
    %c0_i32_1 = arith.constant 0 : i32
    return %c0_i32, %c0_i32_0 : i32, i32
  }
  func.func @transform_3(%arg0: i32) -> (i32, i32) {
    %c0_i32 = arith.constant 0 : i32
    %c0_i32_0 = arith.constant 0 : i32
    %c0_i32_1 = arith.constant 0 : i32
    return %c0_i32, %c0_i32_0 : i32, i32
  }
  func.func @transform_4(%arg0: i32) -> (i32, i32) {
    %c0_i32 = arith.constant 0 : i32
    %c0_i32_0 = arith.constant 0 : i32
    %c0_i32_1 = arith.constant 0 : i32
    return %c0_i32, %c0_i32_0 : i32, i32
  }
  func.func @transform_5(%arg0: i32) -> (i32, i32) {
    %c0_i32 = arith.constant 0 : i32
    %c0_i32_0 = arith.constant 0 : i32
    %c0_i32_1 = arith.constant 0 : i32
    return %c0_i32, %c0_i32_0 : i32, i32
  }
  func.func @transform_6(%arg0: i32) -> (i32, i32) {
    %c0_i32 = arith.constant 0 : i32
    %c0_i32_0 = arith.constant 0 : i32
    %c0_i32_1 = arith.constant 0 : i32
    return %c0_i32, %c0_i32_0 : i32, i32
  }
  func.func @transform_7(%arg0: i32) -> (i32, i32, i32) {
    %c0_i32 = arith.constant 0 : i32
    %c0_i32_0 = arith.constant 0 : i32
    %c0_i32_1 = arith.constant 0 : i32
    return %arg0, %c0_i32, %c0_i32_0 : i32, i32, i32
  }
  func.func @transform_8(%arg0: i32) -> (i32, i32) {
    %c0_i32 = arith.constant 0 : i32
    %c0_i32_0 = arith.constant 0 : i32
    %c0_i32_1 = arith.constant 0 : i32
    return %c0_i32, %c0_i32_0 : i32, i32
  }
  func.func @transform_9(%arg0: i32) -> (i32, i32) {
    %c0_i32 = arith.constant 0 : i32
    %c0_i32_0 = arith.constant 0 : i32
    %c0_i32_1 = arith.constant 0 : i32
    return %c0_i32, %c0_i32_0 : i32, i32
  }
}

module attributes {stable_mosaic.version = 11 : i64} {
  func.func @_apply2_kernel(%arg0: i32, %arg1: memref<1x8x384xbf16, #tpu.memory_space<vmem>>, %arg2: memref<8x72xf32, #tpu.memory_space<vmem>>, %arg3: memref<8x1xf32, #tpu.memory_space<vmem>>, %arg4: memref<8x1xf32, #tpu.memory_space<vmem>>, %arg5: memref<1x324xf32, #tpu.memory_space<vmem>>, %arg6: memref<1x8x324xf32, #tpu.memory_space<vmem>>) attributes {dimension_semantics = [#tpu.dimension_semantics<parallel>], iteration_bounds = array<i64: 2>, scalar_prefetch = 0 : i64, scratch_operands = 0 : i64, tpu.core_type = #tpu.core_type<tc>, window_params = [{transform_indices = @transform_0, window_bounds = array<i64: 1, 8, 384>}, {pipeline_mode = #tpu.pipeline_mode<synchronous>, transform_indices = @transform_1, window_bounds = array<i64: 8, 72>}, {pipeline_mode = #tpu.pipeline_mode<synchronous>, transform_indices = @transform_2, window_bounds = array<i64: 8, 1>}, {pipeline_mode = #tpu.pipeline_mode<synchronous>, transform_indices = @transform_3, window_bounds = array<i64: 8, 1>}, {pipeline_mode = #tpu.pipeline_mode<synchronous>, transform_indices = @transform_4, window_bounds = array<i64: 1, 324>}, {transform_indices = @transform_5, window_bounds = array<i64: 1, 8, 324>}]} {
    %c0 = arith.constant 0 : index
    %c0_0 = arith.constant 0 : index
    %c0_1 = arith.constant 0 : index
    %0 = vector.load %arg1[%c0, %c0_0, %c0_1] : memref<1x8x384xbf16, #tpu.memory_space<vmem>>, vector<1x8x384xbf16>
    %1 = vector.shape_cast %0 : vector<1x8x384xbf16> to vector<8x384xbf16>
    %2 = arith.extf %1 : vector<8x384xbf16> to vector<8x384xf32>
    %3 = vector.extract_strided_slice %2 {offsets = [0, 0], sizes = [8, 324], strides = [1, 1]} : vector<8x384xf32> to vector<8x324xf32>
    %4 = vector.extract_strided_slice %2 {offsets = [0, 1], sizes = [8, 324], strides = [1, 1]} : vector<8x384xf32> to vector<8x324xf32>
    %5 = vector.extract_strided_slice %2 {offsets = [0, 2], sizes = [8, 324], strides = [1, 1]} : vector<8x384xf32> to vector<8x324xf32>
    %6 = vector.extract_strided_slice %2 {offsets = [0, 18], sizes = [8, 324], strides = [1, 1]} : vector<8x384xf32> to vector<8x324xf32>
    %7 = vector.extract_strided_slice %2 {offsets = [0, 19], sizes = [8, 324], strides = [1, 1]} : vector<8x384xf32> to vector<8x324xf32>
    %8 = vector.extract_strided_slice %2 {offsets = [0, 20], sizes = [8, 324], strides = [1, 1]} : vector<8x384xf32> to vector<8x324xf32>
    %9 = vector.extract_strided_slice %2 {offsets = [0, 36], sizes = [8, 324], strides = [1, 1]} : vector<8x384xf32> to vector<8x324xf32>
    %10 = vector.extract_strided_slice %2 {offsets = [0, 37], sizes = [8, 324], strides = [1, 1]} : vector<8x384xf32> to vector<8x324xf32>
    %11 = vector.extract_strided_slice %2 {offsets = [0, 38], sizes = [8, 324], strides = [1, 1]} : vector<8x384xf32> to vector<8x324xf32>
    %12 = tpu.concatenate %3, %4, %5, %6, %7, %8, %9, %10, %11 in 0 : vector<8x324xf32>, vector<8x324xf32>, vector<8x324xf32>, vector<8x324xf32>, vector<8x324xf32>, vector<8x324xf32>, vector<8x324xf32>, vector<8x324xf32>, vector<8x324xf32> -> vector<72x324xf32>
    %c0_2 = arith.constant 0 : index
    %c0_3 = arith.constant 0 : index
    %13 = vector.load %arg2[%c0_2, %c0_3] : memref<8x72xf32, #tpu.memory_space<vmem>>, vector<8x72xf32>
    %cst = arith.constant dense<0.000000e+00> : vector<8x324xf32>
    %14 = tpu.matmul %13, %12, %cst {dimension_numbers = #tpu.dot_dimension_numbers<[1], [0], [0], [1], [0, 0, 1, 1], [], []>} : vector<8x72xf32>, vector<72x324xf32>, vector<8x324xf32> -> vector<8x324xf32>
    %c0_4 = arith.constant 0 : index
    %c0_5 = arith.constant 0 : index
    %15 = vector.load %arg3[%c0_4, %c0_5] : memref<8x1xf32, #tpu.memory_space<vmem>>, vector<8x1xf32>
    %16 = vector.broadcast %15 : vector<8x1xf32> to vector<8x324xf32>
    %17 = arith.mulf %14, %16 : vector<8x324xf32>
    %c0_6 = arith.constant 0 : index
    %c0_7 = arith.constant 0 : index
    %18 = vector.load %arg4[%c0_6, %c0_7] : memref<8x1xf32, #tpu.memory_space<vmem>>, vector<8x1xf32>
    %19 = vector.broadcast %18 : vector<8x1xf32> to vector<8x324xf32>
    %20 = arith.addf %17, %19 : vector<8x324xf32>
    %cst_8 = arith.constant 0.000000e+00 : f32
    %21 = vector.broadcast %cst_8 : f32 to vector<8x324xf32>
    %22 = arith.cmpf ogt, %20, %21 : vector<8x324xf32>
    %cst_9 = arith.constant 0.00999999977 : f32
    %23 = vector.broadcast %cst_9 : f32 to vector<8x324xf32>
    %24 = arith.mulf %23, %20 : vector<8x324xf32>
    %25 = arith.select %22, %20, %24 : vector<8x324xi1>, vector<8x324xf32>
    %c0_10 = arith.constant 0 : index
    %c0_11 = arith.constant 0 : index
    %26 = vector.load %arg5[%c0_10, %c0_11] : memref<1x324xf32, #tpu.memory_space<vmem>>, vector<1x324xf32>
    %27 = vector.broadcast %26 : vector<1x324xf32> to vector<8x324xf32>
    %28 = arith.mulf %25, %27 : vector<8x324xf32>
    %c0_12 = arith.constant 0 : index
    %c0_13 = arith.constant 0 : index
    %c0_14 = arith.constant 0 : index
    %29 = vector.load %arg6[%c0_12, %c0_13, %c0_14] : memref<1x8x324xf32, #tpu.memory_space<vmem>>, vector<1x8x324xf32>
    %30 = vector.shape_cast %29 : vector<1x8x324xf32> to vector<8x324xf32>
    %31 = vector.shape_cast %28 : vector<8x324xf32> to vector<1x8x324xf32>
    tpu.vector_store %arg6[%c0_12, %c0_13, %c0_14], %31 {strides = array<i32>} : memref<1x8x324xf32, #tpu.memory_space<vmem>>, vector<1x8x324xf32>,
    return
  }
  func.func @transform_0(%arg0: i32) -> (i32, i32, i32) {
    %c0_i32 = arith.constant 0 : i32
    %c0_i32_0 = arith.constant 0 : i32
    %c0_i32_1 = arith.constant 0 : i32
    return %arg0, %c0_i32, %c0_i32_0 : i32, i32, i32
  }
  func.func @transform_1(%arg0: i32) -> (i32, i32) {
    %c0_i32 = arith.constant 0 : i32
    %c0_i32_0 = arith.constant 0 : i32
    %c0_i32_1 = arith.constant 0 : i32
    return %c0_i32, %c0_i32_0 : i32, i32
  }
  func.func @transform_2(%arg0: i32) -> (i32, i32) {
    %c0_i32 = arith.constant 0 : i32
    %c0_i32_0 = arith.constant 0 : i32
    %c0_i32_1 = arith.constant 0 : i32
    return %c0_i32, %c0_i32_0 : i32, i32
  }
  func.func @transform_3(%arg0: i32) -> (i32, i32) {
    %c0_i32 = arith.constant 0 : i32
    %c0_i32_0 = arith.constant 0 : i32
    %c0_i32_1 = arith.constant 0 : i32
    return %c0_i32, %c0_i32_0 : i32, i32
  }
  func.func @transform_4(%arg0: i32) -> (i32, i32) {
    %c0_i32 = arith.constant 0 : i32
    %c0_i32_0 = arith.constant 0 : i32
    %c0_i32_1 = arith.constant 0 : i32
    return %c0_i32, %c0_i32_0 : i32, i32
  }
  func.func @transform_5(%arg0: i32) -> (i32, i32, i32) {
    %c0_i32 = arith.constant 0 : i32
    %c0_i32_0 = arith.constant 0 : i32
    %c0_i32_1 = arith.constant 0 : i32
    return %arg0, %c0_i32, %c0_i32_0 : i32, i32, i32
  }
}

</mosaic_0001>

<llo_original>
// kernel: nlu_forward.5
$region0: #{nlu_forward.5}
  #allocation0 [shape = 'u32[]', space=smem, size = 0x4, offset = 0x4, fixed_abs, tag = 'smem constant byte address 0x4 - core index']
  #allocation1 [shape = 'u32[144,128]{1,0:T(1,128)}', space=vmem, size = 0x12000, scoped, tag = 'internal scratch']
  %s0 = inlined_call_operand.vmem [shape: bf16[2,8,384], index: 0, kind: input, shape index: {}]
  %s1 = inlined_call_operand.vmem [shape: f32[8,72], index: 1, kind: input, shape index: {}]
  %s2 = inlined_call_operand.vmem [shape: f32[8,1], index: 2, kind: input, shape index: {}]
  %s3 = inlined_call_operand.vmem [shape: f32[8,1], index: 3, kind: input, shape index: {}]
  %s4 = inlined_call_operand.vmem [shape: f32[1,324], index: 4, kind: input, shape index: {}]
  %s5 = inlined_call_operand.vmem [shape: f32[2,8,324], index: 5, kind: output, shape index: {}]
  %s6 = sld [smem:[#allocation0]]
  $region53: #{nlu_forward.5} parent=0
    _
  %s8 = ssub.s32 1, %s6
  %s9 = scalar_select 0, %s8, %s6
  loop: start=0, step=1, limit=4
  $region2: #{nlu_forward.5} parent=0 // loop_pre_header
    _
  $region3: #{nlu_forward.5} parent=0 // loop_header
    %s11 = sphi 0, %s15
    %p12 = scmp.ge.s32.totalorder %s11, 4
    %s21 = sphi 0, %s23
    %s24 = sphi 0, %s21
    %s25 = sphi 0, %s24
    %s41 = sphi 0, %s25
    %s45 = sphi 0, %s45
    %s47 = sphi 0, %s45
    %s48 = sphi 0, %s47
    %s62 = sphi 0, %s48
    %s66 = sphi 0, %s66
    %s68 = sphi 0, %s66
    %s69 = sphi 0, %s68
    %s83 = sphi 0, %s69
    %s87 = sphi 0, %s87
    %s89 = sphi 0, %s87
    %s90 = sphi 0, %s89
    %s104 = sphi 0, %s90
    %s108 = sphi 0, %s108
    %s110 = sphi 0, %s108
    %s111 = sphi 0, %s110
    %s125 = sphi 0, %s111
    %s131 = sphi 0, %s133
    %s134 = sphi 0, %s131
    %s135 = sphi 0, %s134
    %s151 = sphi 0, %s135
  $region4: #{nlu_forward.5} parent=0 // loop_header_branch
    %14 = sbr.rel (%p12) target = $region8
  $region5: #{nlu_forward.5} parent=0 // loop_body
    %s16 = ssub.s32 %s11, 1
    %s17 = ssub.s32 %s11, 2
    %s18 = sadd.s32 %s11, 1
    %s19 = ssub.s32 %s11, %s18
    %p20 = scmp.eq.s32.totalorder %s19, 0
    %s22 = sadd.s32 %s21, 1
    %s23 = scalar_select %p20, %s21, %s22
    %p26 = pneg %p20
    %p27 = scmp.eq.s32.totalorder %s11, 1
    %p28 = por %p26, %p27
    %p29 = scmp.ne.s32.totalorder %s21, %s24
    %p30 = scmp.eq.s32.totalorder %s11, 0
    %p31 = por %p29, %p30
    %p32 = scmp.ne.s32.totalorder %s21, %s24
    %p33 = scmp.eq.s32.totalorder %s16, 1
    %p34 = por %p32, %p33
    %p35 = scmp.ne.s32.totalorder %s24, %s25
    %p36 = scmp.eq.s32.totalorder %s16, 0
    %p37 = por %p35, %p36
    %p38 = scmp.ne.s32.totalorder %s24, %s25
    %p39 = scmp.eq.s32.totalorder %s17, 1
    %p40 = por %p38, %p39
    %p42 = scmp.ne.s32.totalorder %s25, %s41
    %p43 = scmp.eq.s32.totalorder %s17, 0
    %p44 = por %p42, %p43
    %s46 = sadd.s32 %s45, 1
    %p49 = scmp.eq.s32.totalorder %s11, 1
    %p50 = scmp.ne.s32.totalorder %s45, %s47
    %p51 = scmp.eq.s32.totalorder %s11, 0
    %p52 = por %p50, %p51
    %p53 = scmp.ne.s32.totalorder %s45, %s47
    %p54 = scmp.eq.s32.totalorder %s16, 1
    %p55 = por %p53, %p54
    %p56 = scmp.ne.s32.totalorder %s47, %s48
    %p57 = scmp.eq.s32.totalorder %s16, 0
    %p58 = por %p56, %p57
    %p59 = scmp.ne.s32.totalorder %s47, %s48
    %p60 = scmp.eq.s32.totalorder %s17, 1
    %p61 = por %p59, %p60
    %p63 = scmp.ne.s32.totalorder %s48, %s62
    %p64 = scmp.eq.s32.totalorder %s17, 0
    %p65 = por %p63, %p64
    %s67 = sadd.s32 %s66, 1
    %p70 = scmp.eq.s32.totalorder %s11, 1
    %p71 = scmp.ne.s32.totalorder %s66, %s68
    %p72 = scmp.eq.s32.totalorder %s11, 0
    %p73 = por %p71, %p72
    %p74 = scmp.ne.s32.totalorder %s66, %s68
    %p75 = scmp.eq.s32.totalorder %s16, 1
    %p76 = por %p74, %p75
    %p77 = scmp.ne.s32.totalorder %s68, %s69
    %p78 = scmp.eq.s32.totalorder %s16, 0
    %p79 = por %p77, %p78
    %p80 = scmp.ne.s32.totalorder %s68, %s69
    %p81 = scmp.eq.s32.totalorder %s17, 1
    %p82 = por %p80, %p81
    %p84 = scmp.ne.s32.totalorder %s69, %s83
    %p85 = scmp.eq.s32.totalorder %s17, 0
    %p86 = por %p84, %p85
    %s88 = sadd.s32 %s87, 1
    %p91 = scmp.eq.s32.totalorder %s11, 1
    %p92 = scmp.ne.s32.totalorder %s87, %s89
    %p93 = scmp.eq.s32.totalorder %s11, 0
    %p94 = por %p92, %p93
    %p95 = scmp.ne.s32.totalorder %s87, %s89
    %p96 = scmp.eq.s32.totalorder %s16, 1
    %p97 = por %p95, %p96
    %p98 = scmp.ne.s32.totalorder %s89, %s90
    %p99 = scmp.eq.s32.totalorder %s16, 0
    %p100 = por %p98, %p99
    %p101 = scmp.ne.s32.totalorder %s89, %s90
    %p102 = scmp.eq.s32.totalorder %s17, 1
    %p103 = por %p101, %p102
    %p105 = scmp.ne.s32.totalorder %s90, %s104
    %p106 = scmp.eq.s32.totalorder %s17, 0
    %p107 = por %p105, %p106
    %s109 = sadd.s32 %s108, 1
    %p112 = scmp.eq.s32.totalorder %s11, 1
    %p113 = scmp.ne.s32.totalorder %s108, %s110
    %p114 = scmp.eq.s32.totalorder %s11, 0
    %p115 = por %p113, %p114
    %p116 = scmp.ne.s32.totalorder %s108, %s110
    %p117 = scmp.eq.s32.totalorder %s16, 1
    %p118 = por %p116, %p117
    %p119 = scmp.ne.s32.totalorder %s110, %s111
    %p120 = scmp.eq.s32.totalorder %s16, 0
    %p121 = por %p119, %p120
    %p122 = scmp.ne.s32.totalorder %s110, %s111
    %p123 = scmp.eq.s32.totalorder %s17, 1
    %p124 = por %p122, %p123
    %p126 = scmp.ne.s32.totalorder %s111, %s125
    %p127 = scmp.eq.s32.totalorder %s17, 0
    %p128 = por %p126, %p127
    %s129 = ssub.s32 %s11, %s18
    %p130 = scmp.eq.s32.totalorder %s129, 0
    %s132 = sadd.s32 %s131, 1
    %s133 = scalar_select %p130, %s131, %s132
    %p136 = pneg %p130
    %p137 = scmp.eq.s32.totalorder %s11, 1
    %p138 = por %p136, %p137
    %p139 = scmp.ne.s32.totalorder %s131, %s134
    %p140 = scmp.eq.s32.totalorder %s11, 0
    %p141 = por %p139, %p140
    %p142 = scmp.ne.s32.totalorder %s131, %s134
    %p143 = scmp.eq.s32.totalorder %s16, 1
    %p144 = por %p142, %p143
    %p145 = scmp.ne.s32.totalorder %s134, %s135
    %p146 = scmp.eq.s32.totalorder %s16, 0
    %p147 = por %p145, %p146
    %p148 = scmp.ne.s32.totalorder %s134, %s135
    %p149 = scmp.eq.s32.totalorder %s17, 1
    %p150 = por %p148, %p149
    %p152 = scmp.ne.s32.totalorder %s135, %s151
    %p153 = scmp.eq.s32.totalorder %s17, 0
    %p154 = por %p152, %p153
    %p155 = scmp.le.s32.totalorder 1, %s11
    %p156 = scmp.lt.s32.totalorder %s11, 3
    %p157 = pnand %p155, %p156
    %p158 = pneg %p157
    // Predicated region
    $region9: #{nlu_forward.5} parent=5 // pred_check
      _
    $region10: #{nlu_forward.5} parent=5 // pred_check_branch
      %160 = sbr.rel (%p157) target = $region12
    $region11: #{nlu_forward.5} parent=5 // pred_region
      %s161 = ssub.s32 %s11, 1
      // Predicated region
      $region13: #{nlu_forward.5} parent=11 // pred_check
        %p162 = pneg %p58
      $region14: #{nlu_forward.5} parent=11 // pred_check_branch
        %164 = sbr.rel (%p162) target = $region16
      $region15: #{nlu_forward.5} parent=11 // pred_region
        _
      $region16: #{nlu_forward.5} parent=11 // pred_fallthru
        _
      // Predicated region
      $region17: #{nlu_forward.5} parent=11 // pred_check
        %p165 = pneg %p79
      $region18: #{nlu_forward.5} parent=11 // pred_check_branch
        %167 = sbr.rel (%p165) target = $region20
      $region19: #{nlu_forward.5} parent=11 // pred_region
        _
      $region20: #{nlu_forward.5} parent=11 // pred_fallthru
        _
      // Predicated region
      $region21: #{nlu_forward.5} parent=11 // pred_check
        %p168 = pneg %p100
      $region22: #{nlu_forward.5} parent=11 // pred_check_branch
        %170 = sbr.rel (%p168) target = $region24
      $region23: #{nlu_forward.5} parent=11 // pred_region
        _
      $region24: #{nlu_forward.5} parent=11 // pred_fallthru
        _
      // Predicated region
      $region25: #{nlu_forward.5} parent=11 // pred_check
        %p171 = pneg %p121
      $region26: #{nlu_forward.5} parent=11 // pred_check_branch
        %173 = sbr.rel (%p171) target = $region28
      $region27: #{nlu_forward.5} parent=11 // pred_region
        _
      $region28: #{nlu_forward.5} parent=11 // pred_fallthru
        _
    $region12: #{nlu_forward.5} parent=5 // pred_fallthru
      _
    %p174 = scmp.lt.s32.totalorder %s11, 2
    // Predicated region
    $region29: #{nlu_forward.5} parent=5 // pred_check
      %p175 = pneg %p174
    $region30: #{nlu_forward.5} parent=5 // pred_check_branch
      %177 = sbr.rel (%p175) target = $region32
    $region31: #{nlu_forward.5} parent=5 // pred_region
      // Predicated region
      $region33: #{nlu_forward.5} parent=31 // pred_check
        %p178 = pneg %p31
      $region34: #{nlu_forward.5} parent=31 // pred_check_branch
        %180 = sbr.rel (%p178) target = $region36
      $region35: #{nlu_forward.5} parent=31 // pred_region
        %p181 = scmp.lt.s32.totalorder %s11, 1
        %s182 = scalar_select %p181, %s11, 1
        %s183 = smul.addr %s182, 3
        %s184 = smul.addr %s183, 4
        %s185 = scalar_lea.vmem %s0, %s184
      $region36: #{nlu_forward.5} parent=31 // pred_fallthru
        _
    $region32: #{nlu_forward.5} parent=5 // pred_fallthru
      _
    %p186 = scmp.le.s32.totalorder 1, %s11
    %p187 = scmp.lt.s32.totalorder %s11, 3
    %p188 = pnand %p186, %p187
    %p189 = pneg %p188
    // Predicated region
    $region37: #{nlu_forward.5} parent=5 // pred_check
      _
    $region38: #{nlu_forward.5} parent=5 // pred_check_branch
      %191 = sbr.rel (%p188) target = $region40
    $region39: #{nlu_forward.5} parent=5 // pred_region
      %s192 = ssub.s32 %s11, 1
      %p193 = scmp.lt.s32.totalorder %s16, 1
      %s194 = scalar_select %p193, %s16, 1
      %s195 = smul.addr %s194, 3
      %s196 = smul.addr %s195, 4
      %s197 = scalar_lea.vmem %s0, %s196
      %p198 = pneg %p37
      %p199 = pneg %p34
      %p200 = pneg %p58
      %p201 = pneg %p55
      %p202 = pneg %p79
      %p203 = pneg %p76
      %p204 = pneg %p100
      %p205 = pneg %p97
      %p206 = pneg %p121
      %p207 = pneg %p118
      %p208 = pneg %p147
      %p209 = pneg %p144
      %p210 = scmp.lt.s32.totalorder %s16, 1
      %s211 = scalar_select %p210, %s16, 1
      %s212 = smul.addr %s211, 3
      %s213 = smul.addr %s212, 8
      %s214 = scalar_lea.vmem %s5, %s213
      %p215 = scmp.lt.s32.totalorder %s16, 1
      %s216 = scalar_select %p215, %s16, 1
      %s217 = smul.addr %s216, 3
      %s218 = smul.addr %s217, 4
      %s219 = scalar_lea.vmem %s0, %s218
      %p220 = scmp.lt.s32.totalorder %s16, 1
      %s221 = scalar_select %p220, %s16, 1
      %s222 = smul.addr %s221, 3
      %s223 = smul.addr %s222, 8
      %s224 = scalar_lea.vmem %s5, %s223
      %v225 = vld [vmem:[%s219] sm:$0xff]
      %v226 = vld [vmem:[%s219 + $0x8] sm:$0xf]
      %v227 = vunpack.c.l.bf16 %v225
      %v228 = vunpack.c.h.bf16 %v225
      %v229 = vunpack.c.l.bf16 %v226
      %233 = vrot.lane.b32.xlu0 %v227, 127
      %v234 = vpop.permute.xlu0 %233
      %235 = vrot.lane.b32.xlu0 %v228, 127
      %v236 = vpop.permute.xlu0 %235
      %237 = vrot.lane.b32.xlu0 %v229, 127
      %v238 = vpop.permute.xlu0 %237
      %vm239 = vcmask 1039360
      %v240 = vsel %vm239, %v234, %v236
      %v241 = vsel %vm239, %v236, %v238
      %245 = vrot.lane.b32.xlu0 %v227, 126
      %v246 = vpop.permute.xlu0 %245
      %247 = vrot.lane.b32.xlu0 %v228, 126
      %v248 = vpop.permute.xlu0 %247
      %249 = vrot.lane.b32.xlu0 %v229, 126
      %v250 = vpop.permute.xlu0 %249
      %vm251 = vcmask 1031168
      %v252 = vsel %vm251, %v246, %v248
      %v253 = vsel %vm251, %v248, %v250
      %257 = vrot.lane.b32.xlu0 %v227, 110
      %v258 = vpop.permute.xlu0 %257
      %259 = vrot.lane.b32.xlu0 %v228, 110
      %v260 = vpop.permute.xlu0 %259
      %261 = vrot.lane.b32.xlu0 %v229, 110
      %v262 = vpop.permute.xlu0 %261
      %vm263 = vcmask 900096
      %v264 = vsel %vm263, %v258, %v260
      %v265 = vsel %vm263, %v260, %v262
      %269 = vrot.lane.b32.xlu0 %v227, 109
      %v270 = vpop.permute.xlu0 %269
      %271 = vrot.lane.b32.xlu0 %v228, 109
      %v272 = vpop.permute.xlu0 %271
      %273 = vrot.lane.b32.xlu0 %v229, 109
      %v274 = vpop.permute.xlu0 %273
      %vm275 = vcmask 891904
      %v276 = vsel %vm275, %v270, %v272
      %v277 = vsel %vm275, %v272, %v274
      %281 = vrot.lane.b32.xlu0 %v227, 108
      %v282 = vpop.permute.xlu0 %281
      %283 = vrot.lane.b32.xlu0 %v228, 108
      %v284 = vpop.permute.xlu0 %283
      %285 = vrot.lane.b32.xlu0 %v229, 108
      %v286 = vpop.permute.xlu0 %285
      %vm287 = vcmask 883712
      %v288 = vsel %vm287, %v282, %v284
      %v289 = vsel %vm287, %v284, %v286
      %293 = vrot.lane.b32.xlu0 %v227, 92
      %v294 = vpop.permute.xlu0 %293
      %295 = vrot.lane.b32.xlu0 %v228, 92
      %v296 = vpop.permute.xlu0 %295
      %297 = vrot.lane.b32.xlu0 %v229, 92
      %v298 = vpop.permute.xlu0 %297
      %vm299 = vcmask 752640
      %v300 = vsel %vm299, %v294, %v296
      %v301 = vsel %vm299, %v296, %v298
      %305 = vrot.lane.b32.xlu0 %v227, 91
      %v306 = vpop.permute.xlu0 %305
      %307 = vrot.lane.b32.xlu0 %v228, 91
      %v308 = vpop.permute.xlu0 %307
      %309 = vrot.lane.b32.xlu0 %v229, 91
      %v310 = vpop.permute.xlu0 %309
      %vm311 = vcmask 744448
      %v312 = vsel %vm311, %v306, %v308
      %v313 = vsel %vm311, %v308, %v310
      %317 = vrot.lane.b32.xlu0 %v227, 90
      %v318 = vpop.permute.xlu0 %317
      %319 = vrot.lane.b32.xlu0 %v228, 90
      %v320 = vpop.permute.xlu0 %319
      %321 = vrot.lane.b32.xlu0 %v229, 90
      %v322 = vpop.permute.xlu0 %321
      %vm323 = vcmask 736256
      %v324 = vsel %vm323, %v318, %v320
      %v325 = vsel %vm323, %v320, %v322
      %v329 = vld [vmem:[%s1] sm:$0xff]
      %vm330 = vcmask 588800
      %v332 = vsel %vm330, %v329, 0
      %334 = vmatprep.subr.mxu0 %v228
      %335 = vmatpush1.msra.mxu0 %v227
      %336 = vmatprep.subr.mxu0 %v241
      %337 = vmatpush1.msra.mxu0 %v240
      %338 = vmatprep.subr.mxu0 %v253
      %339 = vmatpush1.msra.mxu0 %v252
      %340 = vmatprep.subr.mxu0 %v265
      %341 = vmatpush1.msra.mxu0 %v264
      %342 = vmatprep.subr.mxu0 %v277
      %343 = vmatpush1.msra.mxu0 %v276
      %344 = vmatprep.subr.mxu0 %v289
      %345 = vmatpush1.msra.mxu0 %v288
      %346 = vmatprep.subr.mxu0 %v301
      %347 = vmatpush1.msra.mxu0 %v300
      %348 = vmatprep.subr.mxu0 %v313
      %349 = vmatpush1.msra.mxu0 %v312
      %350 = vmatprep.subr.mxu0 %v325
      %351 = vmatpush1.msra.mxu0 %v324
      %352 = vmatprep.subr.mxu0 0.0
      %353 = vmatpush1.msra.mxu0 0.0
      %354 = vmatprep.subr.mxu0 0.0
      %355 = vmatpush1.msra.mxu0 0.0
      %356 = vmatprep.subr.mxu0 0.0
      %357 = vmatpush1.msra.mxu0 0.0
      %358 = vmatprep.subr.mxu0 0.0
      %359 = vmatpush1.msra.mxu0 0.0
      %360 = vmatprep.subr.mxu0 0.0
      %361 = vmatpush1.msra.mxu0 0.0
      %362 = vmatprep.subr.mxu0 0.0
      %363 = vmatpush1.msra.mxu0 0.0
      %364 = vmatprep.subr.mxu0 0.0
      %365 = vmatpush1.msra.mxu0 0.0
      %366 = vmatprep.subr.mxu0 0.0
      %367 = vmatpush1.msra.mxu0 0.0
      %368 = vmatprep.subr.mxu0 0.0
      %369 = vmatpush1.msra.mxu0 0.0
      %370 = vmatprep.subr.mxu0 0.0
      %371 = vmatpush1.msra.mxu0 0.0
      %372 = vmatprep.subr.mxu0 0.0
      %373 = vmatpush1.msra.mxu0 0.0
      %374 = vmatprep.subr.mxu0 0.0
      %375 = vmatpush1.msra.mxu0 0.0
      %376 = vmatprep.subr.mxu0 0.0
      %377 = vmatpush1.msra.mxu0 0.0
      %378 = vmatprep.subr.mxu0 0.0
      %379 = vmatpush1.msra.mxu0 0.0
      %380 = vmatprep.subr.mxu0 0.0
      %381 = vmatpush1.msra.mxu0 0.0
      %382 = vmatprep.subr.mxu0 0.0
      %383 = vmatpush1.msra.mxu0 0.0
      %384 = vmatprep.subr.mxu0 0.0
      %385 = vmatpush1.msra.mxu0 0.0
      %386 = vmatprep.subr.mxu0 0.0
      %387 = vmatpush1.msra.mxu0 0.0
      %388 = vmatprep.subr.mxu0 0.0
      %389 = vmatpush1.msra.mxu0 0.0
      %390 = vmatprep.subr.mxu0 0.0
      %391 = vmatpush1.msra.mxu0 0.0
      %392 = vmatprep.subr.mxu0 0.0
      %393 = vmatpush1.msra.mxu0 0.0
      %394 = vmatprep.subr.mxu0 0.0
      %395 = vmatpush1.msra.mxu0 0.0
      %396 = vmatprep.subr.mxu0 0.0
      %397 = vmatpush1.msra.mxu0 0.0
      %398 = vmatprep.mubr.f32.mxu0 0.0
      %399 = vmatmul.mubr.f32.gmra.mrb[0].mxu0 %v332
      %v400 = vpop.f32.mrb[0].mxu0
      %v401 = vadd.f32 0.0, %v400
      %v402 = vpop.f32.mrb[0].mxu0
      %v403 = vadd.f32 0.0, %v402
      %404 = vdwg.mxu0
      %405 = vmatprep.subr.mxu0 0.0
      %406 = vmatpush1.msra.mxu0 %v229
      %407 = vmatprep.subr.mxu0 0.0
      %408 = vmatpush1.msra.mxu0 %v238
      %409 = vmatprep.subr.mxu0 0.0
      %410 = vmatpush1.msra.mxu0 %v250
      %411 = vmatprep.subr.mxu0 0.0
      %412 = vmatpush1.msra.mxu0 %v262
      %413 = vmatprep.subr.mxu0 0.0
      %414 = vmatpush1.msra.mxu0 %v274
      %415 = vmatprep.subr.mxu0 0.0
      %416 = vmatpush1.msra.mxu0 %v286
      %417 = vmatprep.subr.mxu0 0.0
      %418 = vmatpush1.msra.mxu0 %v298
      %419 = vmatprep.subr.mxu0 0.0
      %420 = vmatpush1.msra.mxu0 %v310
      %421 = vmatprep.subr.mxu0 0.0
      %422 = vmatpush1.msra.mxu0 %v322
      %423 = vmatprep.subr.mxu0 0.0
      %424 = vmatpush1.msra.mxu0 0.0
      %425 = vmatprep.subr.mxu0 0.0
      %426 = vmatpush1.msra.mxu0 0.0
      %427 = vmatprep.subr.mxu0 0.0
      %428 = vmatpush1.msra.mxu0 0.0
      %429 = vmatprep.subr.mxu0 0.0
      %430 = vmatpush1.msra.mxu0 0.0
      %431 = vmatprep.subr.mxu0 0.0
      %432 = vmatpush1.msra.mxu0 0.0
      %433 = vmatprep.subr.mxu0 0.0
      %434 = vmatpush1.msra.mxu0 0.0
      %435 = vmatprep.subr.mxu0 0.0
      %436 = vmatpush1.msra.mxu0 0.0
      %437 = vmatprep.subr.mxu0 0.0
      %438 = vmatpush1.msra.mxu0 0.0
      %439 = vmatprep.subr.mxu0 0.0
      %440 = vmatpush1.msra.mxu0 0.0
      %441 = vmatprep.subr.mxu0 0.0
      %442 = vmatpush1.msra.mxu0 0.0
      %443 = vmatprep.subr.mxu0 0.0
      %444 = vmatpush1.msra.mxu0 0.0
      %445 = vmatprep.subr.mxu0 0.0
      %446 = vmatpush1.msra.mxu0 0.0
      %447 = vmatprep.subr.mxu0 0.0
      %448 = vmatpush1.msra.mxu0 0.0
      %449 = vmatprep.subr.mxu0 0.0
      %450 = vmatpush1.msra.mxu0 0.0
      %451 = vmatprep.subr.mxu0 0.0
      %452 = vmatpush1.msra.mxu0 0.0
      %453 = vmatprep.subr.mxu0 0.0
      %454 = vmatpush1.msra.mxu0 0.0
      %455 = vmatprep.subr.mxu0 0.0
      %456 = vmatpush1.msra.mxu0 0.0
      %457 = vmatprep.subr.mxu0 0.0
      %458 = vmatpush1.msra.mxu0 0.0
      %459 = vmatprep.subr.mxu0 0.0
      %460 = vmatpush1.msra.mxu0 0.0
      %461 = vmatprep.subr.mxu0 0.0
      %462 = vmatpush1.msra.mxu0 0.0
      %463 = vmatprep.subr.mxu0 0.0
      %464 = vmatpush1.msra.mxu0 0.0
      %465 = vmatprep.subr.mxu0 0.0
      %466 = vmatpush1.msra.mxu0 0.0
      %467 = vmatprep.subr.mxu0 0.0
      %468 = vmatpush1.msra.mxu0 0.0
      %469 = vmatprep.mubr.f32.mxu0 0.0
      %470 = vmatmul.mubr.f32.gmra.mrb[0].mxu0 %v332
      %v471 = vpop.f32.mrb[0].mxu0
      %v472 = vadd.f32 0.0, %v471
      %v473 = vpop.f32.mrb[0].mxu0
      %474 = vdwg.mxu0
      %v475 = vld [vmem:[%s2] sm:$0xff]
      %477 = vset.pattern.permute.xlu0 0
      %478 = vperm.xlu0 %477, %v475
      %v479 = vpop.permute.xlu0 %478
      %v481 = vmul.f32 %v401, %v479
      %v482 = vmul.f32 %v403, %v479
      %v483 = vmul.f32 %v472, %v479
      %v484 = vld [vmem:[%s3] sm:$0xff]
      %486 = vset.pattern.permute.xlu0 0
      %487 = vperm.xlu0 %486, %v484
      %v488 = vpop.permute.xlu0 %487
      %v490 = vadd.f32 %v481, %v488
      %v491 = vadd.f32 %v482, %v488
      %v492 = vadd.f32 %v483, %v488
      %vm493 = vcmp.gt.f32.partialorder %v490, 0.0
      %vm494 = vcmp.gt.f32.partialorder %v491, 0.0
      %vm495 = vcmp.gt.f32.partialorder %v492, 0.0
      %v496 = vmul.f32 %v490, 0.01
      %v497 = vmul.f32 %v491, 0.01
      %v498 = vmul.f32 %v492, 0.01
      %v499 = vsel %vm493, %v490, %v496
      %v500 = vsel %vm494, %v491, %v497
      %v501 = vsel %vm495, %v492, %v498
      %v502 = vld [vmem:[%s4] sm:$0x7]
      %v504 = vlaneseq
      %v505 = vshrl.u32 %v504, 7
      %v506 = vsub.s32 0, %v505
      %v507 = vrot.slane %v502, %v506
      %v508 = vlaneseq
      %v509 = vshrl.u32 %v508, 7
      %v510 = vsub.s32 1, %v509
      %v511 = vrot.slane %v502, %v510
      %v512 = vlaneseq
      %v513 = vshrl.u32 %v512, 7
      %v514 = vsub.s32 2, %v513
      %v515 = vrot.slane %v502, %v514
      %v519 = vmul.f32 %v499, %v507
      %v520 = vmul.f32 %v500, %v511
      %v521 = vmul.f32 %v501, %v515
      %522 = vst [vmem:[%s224] sm:$0xff] %v519
      %523 = vst [vmem:[%s224 + $0x8] sm:$0xff] %v520
      %vm524 = vcmask 556032
      %525 = vst.msk [vmem:[%s224 + $0x10] sm:$0xff] %vm524, %v521
      %p526 = scmp.lt.s32.totalorder %s16, 1
      %s527 = scalar_select %p526, %s16, 1
      %s528 = smul.addr %s527, 3
      %s529 = smul.addr %s528, 8
      %s530 = scalar_lea.vmem %s5, %s529
      // Predicated region
      $region41: #{nlu_forward.5} parent=39 // pred_check
        %p531 = pneg %p144
      $region42: #{nlu_forward.5} parent=39 // pred_check_branch
        %533 = sbr.rel (%p531) target = $region44
      $region43: #{nlu_forward.5} parent=39 // pred_region
        _
      $region44: #{nlu_forward.5} parent=39 // pred_fallthru
        _
    $region40: #{nlu_forward.5} parent=5 // pred_fallthru
      _
    %p534 = scmp.le.s32.totalorder 2, %s11
    // Predicated region
    $region45: #{nlu_forward.5} parent=5 // pred_check
      %p535 = pneg %p534
    $region46: #{nlu_forward.5} parent=5 // pred_check_branch
      %537 = sbr.rel (%p535) target = $region48
    $region47: #{nlu_forward.5} parent=5 // pred_region
      %s538 = ssub.s32 %s11, 2
      // Predicated region
      $region49: #{nlu_forward.5} parent=47 // pred_check
        %p539 = pneg %p150
      $region50: #{nlu_forward.5} parent=47 // pred_check_branch
        %541 = sbr.rel (%p539) target = $region52
      $region51: #{nlu_forward.5} parent=47 // pred_region
        %p542 = scmp.lt.s32.totalorder %s17, 1
        %s543 = scalar_select %p542, %s17, 1
        %s544 = smul.addr %s543, 3
        %s545 = smul.addr %s544, 8
        %s546 = scalar_lea.vmem %s5, %s545
      $region52: #{nlu_forward.5} parent=47 // pred_fallthru
        _
    $region48: #{nlu_forward.5} parent=5 // pred_fallthru
      _
  $region6: #{nlu_forward.5} parent=0 // loop_footer
    %s15 = sadd.s32 1, %s11
  $region7: #{nlu_forward.5} parent=0 // loop_footer_branch
    %10 = sbr.rel target = $region3
  $region8: #{nlu_forward.5} parent=0 // loop_exit
    _

// kernel: nlu_forward.3
$region0: #{nlu_forward.3}
  #allocation0 [shape = 'u32[]', space=smem, size = 0x4, offset = 0x4, fixed_abs, tag = 'smem constant byte address 0x4 - core index']
  #allocation1 [shape = 'u32[144,128]{1,0:T(1,128)}', space=vmem, size = 0x12000, scoped, tag = 'internal scratch']
  %s0 = inlined_call_operand.vmem [shape: bf16[2,8,512], index: 0, kind: input, shape index: {}]
  %s1 = inlined_call_operand.vmem [shape: f32[8,72], index: 1, kind: input, shape index: {}]
  %s2 = inlined_call_operand.vmem [shape: f32[1,384], index: 2, kind: input, shape index: {}]
  %s3 = inlined_call_operand.vmem [shape: f32[8,1], index: 3, kind: output, shape index: {0}]
  %s4 = inlined_call_operand.vmem [shape: f32[8,1], index: 4, kind: output, shape index: {1}]
  %5 = xla_tuple %s3, %s4
  %s6 = sld [smem:[#allocation0]]
  $region57: #{nlu_forward.3} parent=0
    _
  %s8 = ssub.s32 1, %s6
  %s9 = scalar_select 0, %s8, %s6
  loop: start=0, step=1, limit=4
  $region2: #{nlu_forward.3} parent=0 // loop_pre_header
    _
  $region3: #{nlu_forward.3} parent=0 // loop_header
    %s11 = sphi 0, %s15
    %p12 = scmp.ge.s32.totalorder %s11, 4
    %s21 = sphi 0, %s23
    %s24 = sphi 0, %s21
    %s25 = sphi 0, %s24
    %s41 = sphi 0, %s25
    %s45 = sphi 0, %s45
    %s47 = sphi 0, %s45
    %s48 = sphi 0, %s47
    %s62 = sphi 0, %s48
    %s66 = sphi 0, %s66
    %s68 = sphi 0, %s66
    %s69 = sphi 0, %s68
    %s83 = sphi 0, %s69
    %s87 = sphi 0, %s87
    %s89 = sphi 0, %s87
    %s90 = sphi 0, %s89
    %s104 = sphi 0, %s90
    %s108 = sphi 0, %s108
    %s110 = sphi 0, %s108
    %s111 = sphi 0, %s110
    %s125 = sphi 0, %s111
  $region4: #{nlu_forward.3} parent=0 // loop_header_branch
    %14 = sbr.rel (%p12) target = $region8
  $region5: #{nlu_forward.3} parent=0 // loop_body
    %s16 = ssub.s32 %s11, 1
    %s17 = ssub.s32 %s11, 2
    %s18 = sadd.s32 %s11, 1
    %s19 = ssub.s32 %s11, %s18
    %p20 = scmp.eq.s32.totalorder %s19, 0
    %s22 = sadd.s32 %s21, 1
    %s23 = scalar_select %p20, %s21, %s22
    %p26 = pneg %p20
    %p27 = scmp.eq.s32.totalorder %s11, 1
    %p28 = por %p26, %p27
    %p29 = scmp.ne.s32.totalorder %s21, %s24
    %p30 = scmp.eq.s32.totalorder %s11, 0
    %p31 = por %p29, %p30
    %p32 = scmp.ne.s32.totalorder %s21, %s24
    %p33 = scmp.eq.s32.totalorder %s16, 1
    %p34 = por %p32, %p33
    %p35 = scmp.ne.s32.totalorder %s24, %s25
    %p36 = scmp.eq.s32.totalorder %s16, 0
    %p37 = por %p35, %p36
    %p38 = scmp.ne.s32.totalorder %s24, %s25
    %p39 = scmp.eq.s32.totalorder %s17, 1
    %p40 = por %p38, %p39
    %p42 = scmp.ne.s32.totalorder %s25, %s41
    %p43 = scmp.eq.s32.totalorder %s17, 0
    %p44 = por %p42, %p43
    %s46 = sadd.s32 %s45, 1
    %p49 = scmp.eq.s32.totalorder %s11, 1
    %p50 = scmp.ne.s32.totalorder %s45, %s47
    %p51 = scmp.eq.s32.totalorder %s11, 0
    %p52 = por %p50, %p51
    %p53 = scmp.ne.s32.totalorder %s45, %s47
    %p54 = scmp.eq.s32.totalorder %s16, 1
    %p55 = por %p53, %p54
    %p56 = scmp.ne.s32.totalorder %s47, %s48
    %p57 = scmp.eq.s32.totalorder %s16, 0
    %p58 = por %p56, %p57
    %p59 = scmp.ne.s32.totalorder %s47, %s48
    %p60 = scmp.eq.s32.totalorder %s17, 1
    %p61 = por %p59, %p60
    %p63 = scmp.ne.s32.totalorder %s48, %s62
    %p64 = scmp.eq.s32.totalorder %s17, 0
    %p65 = por %p63, %p64
    %s67 = sadd.s32 %s66, 1
    %p70 = scmp.eq.s32.totalorder %s11, 1
    %p71 = scmp.ne.s32.totalorder %s66, %s68
    %p72 = scmp.eq.s32.totalorder %s11, 0
    %p73 = por %p71, %p72
    %p74 = scmp.ne.s32.totalorder %s66, %s68
    %p75 = scmp.eq.s32.totalorder %s16, 1
    %p76 = por %p74, %p75
    %p77 = scmp.ne.s32.totalorder %s68, %s69
    %p78 = scmp.eq.s32.totalorder %s16, 0
    %p79 = por %p77, %p78
    %p80 = scmp.ne.s32.totalorder %s68, %s69
    %p81 = scmp.eq.s32.totalorder %s17, 1
    %p82 = por %p80, %p81
    %p84 = scmp.ne.s32.totalorder %s69, %s83
    %p85 = scmp.eq.s32.totalorder %s17, 0
    %p86 = por %p84, %p85
    %s88 = sadd.s32 %s87, 1
    %p91 = scmp.eq.s32.totalorder %s11, 1
    %p92 = scmp.ne.s32.totalorder %s87, %s89
    %p93 = scmp.eq.s32.totalorder %s11, 0
    %p94 = por %p92, %p93
    %p95 = scmp.ne.s32.totalorder %s87, %s89
    %p96 = scmp.eq.s32.totalorder %s16, 1
    %p97 = por %p95, %p96
    %p98 = scmp.ne.s32.totalorder %s89, %s90
    %p99 = scmp.eq.s32.totalorder %s16, 0
    %p100 = por %p98, %p99
    %p101 = scmp.ne.s32.totalorder %s89, %s90
    %p102 = scmp.eq.s32.totalorder %s17, 1
    %p103 = por %p101, %p102
    %p105 = scmp.ne.s32.totalorder %s90, %s104
    %p106 = scmp.eq.s32.totalorder %s17, 0
    %p107 = por %p105, %p106
    %s109 = sadd.s32 %s108, 1
    %p112 = scmp.eq.s32.totalorder %s11, 1
    %p113 = scmp.ne.s32.totalorder %s108, %s110
    %p114 = scmp.eq.s32.totalorder %s11, 0
    %p115 = por %p113, %p114
    %p116 = scmp.ne.s32.totalorder %s108, %s110
    %p117 = scmp.eq.s32.totalorder %s16, 1
    %p118 = por %p116, %p117
    %p119 = scmp.ne.s32.totalorder %s110, %s111
    %p120 = scmp.eq.s32.totalorder %s16, 0
    %p121 = por %p119, %p120
    %p122 = scmp.ne.s32.totalorder %s110, %s111
    %p123 = scmp.eq.s32.totalorder %s17, 1
    %p124 = por %p122, %p123
    %p126 = scmp.ne.s32.totalorder %s111, %s125
    %p127 = scmp.eq.s32.totalorder %s17, 0
    %p128 = por %p126, %p127
    %p129 = scmp.le.s32.totalorder 1, %s11
    %p130 = scmp.lt.s32.totalorder %s11, 3
    %p131 = pnand %p129, %p130
    %p132 = pneg %p131
    // Predicated region
    $region9: #{nlu_forward.3} parent=5 // pred_check
      _
    $region10: #{nlu_forward.3} parent=5 // pred_check_branch
      %134 = sbr.rel (%p131) target = $region12
    $region11: #{nlu_forward.3} parent=5 // pred_region
      %s135 = ssub.s32 %s11, 1
      // Predicated region
      $region13: #{nlu_forward.3} parent=11 // pred_check
        %p136 = pneg %p58
      $region14: #{nlu_forward.3} parent=11 // pred_check_branch
        %138 = sbr.rel (%p136) target = $region16
      $region15: #{nlu_forward.3} parent=11 // pred_region
        _
      $region16: #{nlu_forward.3} parent=11 // pred_fallthru
        _
      // Predicated region
      $region17: #{nlu_forward.3} parent=11 // pred_check
        %p139 = pneg %p79
      $region18: #{nlu_forward.3} parent=11 // pred_check_branch
        %141 = sbr.rel (%p139) target = $region20
      $region19: #{nlu_forward.3} parent=11 // pred_region
        _
      $region20: #{nlu_forward.3} parent=11 // pred_fallthru
        _
    $region12: #{nlu_forward.3} parent=5 // pred_fallthru
      _
    %p142 = scmp.lt.s32.totalorder %s11, 2
    // Predicated region
    $region21: #{nlu_forward.3} parent=5 // pred_check
      %p143 = pneg %p142
    $region22: #{nlu_forward.3} parent=5 // pred_check_branch
      %145 = sbr.rel (%p143) target = $region24
    $region23: #{nlu_forward.3} parent=5 // pred_region
      // Predicated region
      $region25: #{nlu_forward.3} parent=23 // pred_check
        %p146 = pneg %p31
      $region26: #{nlu_forward.3} parent=23 // pred_check_branch
        %148 = sbr.rel (%p146) target = $region28
      $region27: #{nlu_forward.3} parent=23 // pred_region
        %p149 = scmp.lt.s32.totalorder %s11, 1
        %s150 = scalar_select %p149, %s11, 1
        %s151 = smul.addr %s150, 4
        %s152 = smul.addr %s151, 4
        %s153 = scalar_lea.vmem %s0, %s152
      $region28: #{nlu_forward.3} parent=23 // pred_fallthru
        _
    $region24: #{nlu_forward.3} parent=5 // pred_fallthru
      _
    %p154 = scmp.le.s32.totalorder 1, %s11
    %p155 = scmp.lt.s32.totalorder %s11, 3
    %p156 = pnand %p154, %p155
    %p157 = pneg %p156
    // Predicated region
    $region29: #{nlu_forward.3} parent=5 // pred_check
      _
    $region30: #{nlu_forward.3} parent=5 // pred_check_branch
      %159 = sbr.rel (%p156) target = $region32
    $region31: #{nlu_forward.3} parent=5 // pred_region
      %s160 = ssub.s32 %s11, 1
      %p161 = scmp.lt.s32.totalorder %s16, 1
      %s162 = scalar_select %p161, %s16, 1
      %s163 = smul.addr %s162, 4
      %s164 = smul.addr %s163, 4
      %s165 = scalar_lea.vmem %s0, %s164
      %p166 = pneg %p37
      %p167 = pneg %p34
      %p168 = pneg %p58
      %p169 = pneg %p55
      %p170 = pneg %p79
      %p171 = pneg %p76
      %p172 = pneg %p100
      %p173 = pneg %p97
      %p174 = pneg %p121
      %p175 = pneg %p118
      %p176 = scmp.lt.s32.totalorder %s16, 1
      %s177 = scalar_select %p176, %s16, 1
      %s178 = smul.addr %s177, 4
      %s179 = smul.addr %s178, 4
      %s180 = scalar_lea.vmem %s0, %s179
      %v181 = vld [vmem:[%s180] sm:$0xff]
      %v182 = vld [vmem:[%s180 + $0x8] sm:$0xff]
      %v183 = vunpack.c.l.bf16 %v181
      %v184 = vunpack.c.h.bf16 %v181
      %v185 = vunpack.c.l.bf16 %v182
      %v186 = vunpack.c.h.bf16 %v182
      %191 = vrot.lane.b32.xlu0 %v183, 127
      %v192 = vpop.permute.xlu0 %191
      %193 = vrot.lane.b32.xlu0 %v184, 127
      %v194 = vpop.permute.xlu0 %193
      %195 = vrot.lane.b32.xlu0 %v185, 127
      %v196 = vpop.permute.xlu0 %195
      %197 = vrot.lane.b32.xlu0 %v186, 127
      %v198 = vpop.permute.xlu0 %197
      %vm199 = vcmask 1039360
      %v200 = vsel %vm199, %v192, %v194
      %v201 = vsel %vm199, %v194, %v196
      %v202 = vsel %vm199, %v196, %v198
      %206 = vrot.lane.b32.xlu0 %v183, 126
      %v207 = vpop.permute.xlu0 %206
      %208 = vrot.lane.b32.xlu0 %v184, 126
      %v209 = vpop.permute.xlu0 %208
      %210 = vrot.lane.b32.xlu0 %v185, 126
      %v211 = vpop.permute.xlu0 %210
      %212 = vrot.lane.b32.xlu0 %v186, 126
      %v213 = vpop.permute.xlu0 %212
      %vm214 = vcmask 1031168
      %v215 = vsel %vm214, %v207, %v209
      %v216 = vsel %vm214, %v209, %v211
      %v217 = vsel %vm214, %v211, %v213
      %221 = vrot.lane.b32.xlu0 %v183, 110
      %v222 = vpop.permute.xlu0 %221
      %223 = vrot.lane.b32.xlu0 %v184, 110
      %v224 = vpop.permute.xlu0 %223
      %225 = vrot.lane.b32.xlu0 %v185, 110
      %v226 = vpop.permute.xlu0 %225
      %227 = vrot.lane.b32.xlu0 %v186, 110
      %v228 = vpop.permute.xlu0 %227
      %vm229 = vcmask 900096
      %v230 = vsel %vm229, %v222, %v224
      %v231 = vsel %vm229, %v224, %v226
      %v232 = vsel %vm229, %v226, %v228
      %236 = vrot.lane.b32.xlu0 %v183, 109
      %v237 = vpop.permute.xlu0 %236
      %238 = vrot.lane.b32.xlu0 %v184, 109
      %v239 = vpop.permute.xlu0 %238
      %240 = vrot.lane.b32.xlu0 %v185, 109
      %v241 = vpop.permute.xlu0 %240
      %242 = vrot.lane.b32.xlu0 %v186, 109
      %v243 = vpop.permute.xlu0 %242
      %vm244 = vcmask 891904
      %v245 = vsel %vm244, %v237, %v239
      %v246 = vsel %vm244, %v239, %v241
      %v247 = vsel %vm244, %v241, %v243
      %251 = vrot.lane.b32.xlu0 %v183, 108
      %v252 = vpop.permute.xlu0 %251
      %253 = vrot.lane.b32.xlu0 %v184, 108
      %v254 = vpop.permute.xlu0 %253
      %255 = vrot.lane.b32.xlu0 %v185, 108
      %v256 = vpop.permute.xlu0 %255
      %257 = vrot.lane.b32.xlu0 %v186, 108
      %v258 = vpop.permute.xlu0 %257
      %vm259 = vcmask 883712
      %v260 = vsel %vm259, %v252, %v254
      %v261 = vsel %vm259, %v254, %v256
      %v262 = vsel %vm259, %v256, %v258
      %266 = vrot.lane.b32.xlu0 %v183, 92
      %v267 = vpop.permute.xlu0 %266
      %268 = vrot.lane.b32.xlu0 %v184, 92
      %v269 = vpop.permute.xlu0 %268
      %270 = vrot.lane.b32.xlu0 %v185, 92
      %v271 = vpop.permute.xlu0 %270
      %272 = vrot.lane.b32.xlu0 %v186, 92
      %v273 = vpop.permute.xlu0 %272
      %vm274 = vcmask 752640
      %v275 = vsel %vm274, %v267, %v269
      %v276 = vsel %vm274, %v269, %v271
      %v277 = vsel %vm274, %v271, %v273
      %281 = vrot.lane.b32.xlu0 %v183, 91
      %v282 = vpop.permute.xlu0 %281
      %283 = vrot.lane.b32.xlu0 %v184, 91
      %v284 = vpop.permute.xlu0 %283
      %285 = vrot.lane.b32.xlu0 %v185, 91
      %v286 = vpop.permute.xlu0 %285
      %287 = vrot.lane.b32.xlu0 %v186, 91
      %v288 = vpop.permute.xlu0 %287
      %vm289 = vcmask 744448
      %v290 = vsel %vm289, %v282, %v284
      %v291 = vsel %vm289, %v284, %v286
      %v292 = vsel %vm289, %v286, %v288
      %296 = vrot.lane.b32.xlu0 %v183, 90
      %v297 = vpop.permute.xlu0 %296
      %298 = vrot.lane.b32.xlu0 %v184, 90
      %v299 = vpop.permute.xlu0 %298
      %300 = vrot.lane.b32.xlu0 %v185, 90
      %v301 = vpop.permute.xlu0 %300
      %302 = vrot.lane.b32.xlu0 %v186, 90
      %v303 = vpop.permute.xlu0 %302
      %vm304 = vcmask 736256
      %v305 = vsel %vm304, %v297, %v299
      %v306 = vsel %vm304, %v299, %v301
      %v307 = vsel %vm304, %v301, %v303
      %v311 = vld [vmem:[%s1] sm:$0xff]
      %vm312 = vcmask 588800
      %v314 = vsel %vm312, %v311, 0
      %316 = vmatprep.subr.mxu0 %v184
      %317 = vmatpush1.msra.mxu0 %v183
      %318 = vmatprep.subr.mxu0 %v201
      %319 = vmatpush1.msra.mxu0 %v200
      %320 = vmatprep.subr.mxu0 %v216
      %321 = vmatpush1.msra.mxu0 %v215
      %322 = vmatprep.subr.mxu0 %v231
      %323 = vmatpush1.msra.mxu0 %v230
      %324 = vmatprep.subr.mxu0 %v246
      %325 = vmatpush1.msra.mxu0 %v245
      %326 = vmatprep.subr.mxu0 %v261
      %327 = vmatpush1.msra.mxu0 %v260
      %328 = vmatprep.subr.mxu0 %v276
      %329 = vmatpush1.msra.mxu0 %v275
      %330 = vmatprep.subr.mxu0 %v291
      %331 = vmatpush1.msra.mxu0 %v290
      %332 = vmatprep.subr.mxu0 %v306
      %333 = vmatpush1.msra.mxu0 %v305
      %334 = vmatprep.subr.mxu0 0.0
      %335 = vmatpush1.msra.mxu0 0.0
      %336 = vmatprep.subr.mxu0 0.0
      %337 = vmatpush1.msra.mxu0 0.0
      %338 = vmatprep.subr.mxu0 0.0
      %339 = vmatpush1.msra.mxu0 0.0
      %340 = vmatprep.subr.mxu0 0.0
      %341 = vmatpush1.msra.mxu0 0.0
      %342 = vmatprep.subr.mxu0 0.0
      %343 = vmatpush1.msra.mxu0 0.0
      %344 = vmatprep.subr.mxu0 0.0
      %345 = vmatpush1.msra.mxu0 0.0
      %346 = vmatprep.subr.mxu0 0.0
      %347 = vmatpush1.msra.mxu0 0.0
      %348 = vmatprep.subr.mxu0 0.0
      %349 = vmatpush1.msra.mxu0 0.0
      %350 = vmatprep.subr.mxu0 0.0
      %351 = vmatpush1.msra.mxu0 0.0
      %352 = vmatprep.subr.mxu0 0.0
      %353 = vmatpush1.msra.mxu0 0.0
      %354 = vmatprep.subr.mxu0 0.0
      %355 = vmatpush1.msra.mxu0 0.0
      %356 = vmatprep.subr.mxu0 0.0
      %357 = vmatpush1.msra.mxu0 0.0
      %358 = vmatprep.subr.mxu0 0.0
      %359 = vmatpush1.msra.mxu0 0.0
      %360 = vmatprep.subr.mxu0 0.0
      %361 = vmatpush1.msra.mxu0 0.0
      %362 = vmatprep.subr.mxu0 0.0
      %363 = vmatpush1.msra.mxu0 0.0
      %364 = vmatprep.subr.mxu0 0.0
      %365 = vmatpush1.msra.mxu0 0.0
      %366 = vmatprep.subr.mxu0 0.0
      %367 = vmatpush1.msra.mxu0 0.0
      %368 = vmatprep.subr.mxu0 0.0
      %369 = vmatpush1.msra.mxu0 0.0
      %370 = vmatprep.subr.mxu0 0.0
      %371 = vmatpush1.msra.mxu0 0.0
      %372 = vmatprep.subr.mxu0 0.0
      %373 = vmatpush1.msra.mxu0 0.0
      %374 = vmatprep.subr.mxu0 0.0
      %375 = vmatpush1.msra.mxu0 0.0
      %376 = vmatprep.subr.mxu0 0.0
      %377 = vmatpush1.msra.mxu0 0.0
      %378 = vmatprep.subr.mxu0 0.0
      %379 = vmatpush1.msra.mxu0 0.0
      %380 = vmatprep.mubr.f32.mxu0 0.0
      %381 = vmatmul.mubr.f32.gmra.mrb[0].mxu0 %v314
      %v382 = vpop.f32.mrb[0].mxu0
      %v383 = vadd.f32 0.0, %v382
      %v384 = vpop.f32.mrb[0].mxu0
      %v385 = vadd.f32 0.0, %v384
      %386 = vdwg.mxu0
      %387 = vmatprep.subr.mxu0 0.0
      %388 = vmatpush1.msra.mxu0 %v185
      %389 = vmatprep.subr.mxu0 0.0
      %390 = vmatpush1.msra.mxu0 %v202
      %391 = vmatprep.subr.mxu0 0.0
      %392 = vmatpush1.msra.mxu0 %v217
      %393 = vmatprep.subr.mxu0 0.0
      %394 = vmatpush1.msra.mxu0 %v232
      %395 = vmatprep.subr.mxu0 0.0
      %396 = vmatpush1.msra.mxu0 %v247
      %397 = vmatprep.subr.mxu0 0.0
      %398 = vmatpush1.msra.mxu0 %v262
      %399 = vmatprep.subr.mxu0 0.0
      %400 = vmatpush1.msra.mxu0 %v277
      %401 = vmatprep.subr.mxu0 0.0
      %402 = vmatpush1.msra.mxu0 %v292
      %403 = vmatprep.subr.mxu0 0.0
      %404 = vmatpush1.msra.mxu0 %v307
      %405 = vmatprep.subr.mxu0 0.0
      %406 = vmatpush1.msra.mxu0 0.0
      %407 = vmatprep.subr.mxu0 0.0
      %408 = vmatpush1.msra.mxu0 0.0
      %409 = vmatprep.subr.mxu0 0.0
      %410 = vmatpush1.msra.mxu0 0.0
      %411 = vmatprep.subr.mxu0 0.0
      %412 = vmatpush1.msra.mxu0 0.0
      %413 = vmatprep.subr.mxu0 0.0
      %414 = vmatpush1.msra.mxu0 0.0
      %415 = vmatprep.subr.mxu0 0.0
      %416 = vmatpush1.msra.mxu0 0.0
      %417 = vmatprep.subr.mxu0 0.0
      %418 = vmatpush1.msra.mxu0 0.0
      %419 = vmatprep.subr.mxu0 0.0
      %420 = vmatpush1.msra.mxu0 0.0
      %421 = vmatprep.subr.mxu0 0.0
      %422 = vmatpush1.msra.mxu0 0.0
      %423 = vmatprep.subr.mxu0 0.0
      %424 = vmatpush1.msra.mxu0 0.0
      %425 = vmatprep.subr.mxu0 0.0
      %426 = vmatpush1.msra.mxu0 0.0
      %427 = vmatprep.subr.mxu0 0.0
      %428 = vmatpush1.msra.mxu0 0.0
      %429 = vmatprep.subr.mxu0 0.0
      %430 = vmatpush1.msra.mxu0 0.0
      %431 = vmatprep.subr.mxu0 0.0
      %432 = vmatpush1.msra.mxu0 0.0
      %433 = vmatprep.subr.mxu0 0.0
      %434 = vmatpush1.msra.mxu0 0.0
      %435 = vmatprep.subr.mxu0 0.0
      %436 = vmatpush1.msra.mxu0 0.0
      %437 = vmatprep.subr.mxu0 0.0
      %438 = vmatpush1.msra.mxu0 0.0
      %439 = vmatprep.subr.mxu0 0.0
      %440 = vmatpush1.msra.mxu0 0.0
      %441 = vmatprep.subr.mxu0 0.0
      %442 = vmatpush1.msra.mxu0 0.0
      %443 = vmatprep.subr.mxu0 0.0
      %444 = vmatpush1.msra.mxu0 0.0
      %445 = vmatprep.subr.mxu0 0.0
      %446 = vmatpush1.msra.mxu0 0.0
      %447 = vmatprep.subr.mxu0 0.0
      %448 = vmatpush1.msra.mxu0 0.0
      %449 = vmatprep.subr.mxu0 0.0
      %450 = vmatpush1.msra.mxu0 0.0
      %451 = vmatprep.mubr.f32.mxu0 0.0
      %452 = vmatmul.mubr.f32.gmra.mrb[0].mxu0 %v314
      %v453 = vpop.f32.mrb[0].mxu0
      %v454 = vadd.f32 0.0, %v453
      %v455 = vpop.f32.mrb[0].mxu0
      %456 = vdwg.mxu0
      %v457 = vld [vmem:[%s2] sm:$0x7]
      %v459 = vlaneseq
      %v460 = vshrl.u32 %v459, 7
      %v461 = vsub.s32 0, %v460
      %v462 = vrot.slane %v457, %v461
      %v463 = vlaneseq
      %v464 = vshrl.u32 %v463, 7
      %v465 = vsub.s32 1, %v464
      %v466 = vrot.slane %v457, %v465
      %v467 = vlaneseq
      %v468 = vshrl.u32 %v467, 7
      %v469 = vsub.s32 2, %v468
      %v470 = vrot.slane %v457, %v469
      %v474 = vmul.f32 %v383, %v462
      %v475 = vmul.f32 %v385, %v466
      %v476 = vmul.f32 %v454, %v470
      %p477 = scmp.eq.s32.totalorder %s16, 0
      // Predicated region
      $region33: #{nlu_forward.3} parent=31 // pred_check
        %p478 = pneg %p477
      $region34: #{nlu_forward.3} parent=31 // pred_check_branch
        %480 = sbr.rel (%p478) target = $region36
      $region35: #{nlu_forward.3} parent=31 // pred_region
        %vm481 = vcmask 7168
        %482 = vst.msk [vmem:[%s3] sm:$0xff] %vm481, 0.0
        %483 = vst.msk [vmem:[%s4] sm:$0xff] %vm481, 0.0
      $region36: #{nlu_forward.3} parent=31 // pred_fallthru
        _
      %v484 = vld [vmem:[%s3] sm:$0xff]
      %v485 = vadd.f32 %v474, %v475
      %v486 = vadd.f32 %v485, %v476
      %487 = vadd.xlane.f32.xlu0 %v486
      %v488 = vpop.xlane.xlu0 %487
      %v489 = vadd.f32 %v484, %v488
      %vm490 = vcmask 7168
      %491 = vst.msk [vmem:[%s3] sm:$0xff] %vm490, %v489
      %v492 = vld [vmem:[%s4] sm:$0xff]
      %v493 = vmul.f32 %v474, %v474
      %v494 = vmul.f32 %v475, %v475
      %v495 = vmul.f32 %v476, %v476
      %v496 = vadd.f32 %v493, %v494
      %v497 = vadd.f32 %v496, %v495
      %498 = vadd.xlane.f32.xlu0 %v497
      %v499 = vpop.xlane.xlu0 %498
      %v500 = vadd.f32 %v492, %v499
      %501 = vst.msk [vmem:[%s4] sm:$0xff] %vm490, %v500
      // Predicated region
      $region37: #{nlu_forward.3} parent=31 // pred_check
        %p502 = pneg %p97
      $region38: #{nlu_forward.3} parent=31 // pred_check_branch
        %504 = sbr.rel (%p502) target = $region40
      $region39: #{nlu_forward.3} parent=31 // pred_region
        _
      $region40: #{nlu_forward.3} parent=31 // pred_fallthru
        _
      // Predicated region
      $region41: #{nlu_forward.3} parent=31 // pred_check
        %p505 = pneg %p118
      $region42: #{nlu_forward.3} parent=31 // pred_check_branch
        %507 = sbr.rel (%p505) target = $region44
      $region43: #{nlu_forward.3} parent=31 // pred_region
        _
      $region44: #{nlu_forward.3} parent=31 // pred_fallthru
        _
      // Predicated region
      $region45: #{nlu_forward.3} parent=31 // pred_check
        %p508 = pneg %p97
      $region46: #{nlu_forward.3} parent=31 // pred_check_branch
        %510 = sbr.rel (%p508) target = $region48
      $region47: #{nlu_forward.3} parent=31 // pred_region
        _
      $region48: #{nlu_forward.3} parent=31 // pred_fallthru
        _
      // Predicated region
      $region49: #{nlu_forward.3} parent=31 // pred_check
        %p511 = pneg %p118
      $region50: #{nlu_forward.3} parent=31 // pred_check_branch
        %513 = sbr.rel (%p511) target = $region52
      $region51: #{nlu_forward.3} parent=31 // pred_region
        _
      $region52: #{nlu_forward.3} parent=31 // pred_fallthru
        _
    $region32: #{nlu_forward.3} parent=5 // pred_fallthru
      _
    %p514 = scmp.le.s32.totalorder 2, %s11
    // Predicated region
    $region53: #{nlu_forward.3} parent=5 // pred_check
      %p515 = pneg %p514
    $region54: #{nlu_forward.3} parent=5 // pred_check_branch
      %517 = sbr.rel (%p515) target = $region56
    $region55: #{nlu_forward.3} parent=5 // pred_region
      %s518 = ssub.s32 %s11, 2
    $region56: #{nlu_forward.3} parent=5 // pred_fallthru
      _
  $region6: #{nlu_forward.3} parent=0 // loop_footer
    %s15 = sadd.s32 1, %s11
  $region7: #{nlu_forward.3} parent=0 // loop_footer_branch
    %10 = sbr.rel target = $region3
  $region8: #{nlu_forward.3} parent=0 // loop_exit
    _

// kernel: nlu_forward.4
$region0: #{nlu_forward.4}
  #allocation0 [shape = 'u32[]', space=smem, size = 0x4, offset = 0x4, fixed_abs, tag = 'smem constant byte address 0x4 - core index']
  #allocation1 [shape = 'u32[144,128]{1,0:T(1,128)}', space=vmem, size = 0x12000, scoped, tag = 'internal scratch']
  %s0 = inlined_call_operand.vmem [shape: bf16[2,8,512], index: 0, kind: input, shape index: {}]
  %s1 = inlined_call_operand.vmem [shape: f32[8,72], index: 1, kind: input, shape index: {}]
  %s2 = inlined_call_operand.vmem [shape: f32[8,1], index: 2, kind: input, shape index: {}]
  %s3 = inlined_call_operand.vmem [shape: f32[8,1], index: 3, kind: input, shape index: {}]
  %s4 = inlined_call_operand.vmem [shape: f32[8,72], index: 4, kind: input, shape index: {}]
  %s5 = inlined_call_operand.vmem [shape: f32[1,384], index: 5, kind: input, shape index: {}]
  %s6 = inlined_call_operand.vmem [shape: f32[1,324], index: 6, kind: input, shape index: {}]
  %s7 = inlined_call_operand.vmem [shape: bf16[2,8,384], index: 7, kind: output, shape index: {0}]
  %s8 = inlined_call_operand.vmem [shape: f32[8,1], index: 8, kind: output, shape index: {1}]
  %s9 = inlined_call_operand.vmem [shape: f32[8,1], index: 9, kind: output, shape index: {2}]
  %10 = xla_tuple %s7, %s8, %s9
  %s11 = sld [smem:[#allocation0]]
  $region81: #{nlu_forward.4} parent=0
    _
  %s13 = ssub.s32 1, %s11
  %s14 = scalar_select 0, %s13, %s11
  loop: start=0, step=1, limit=4
  $region2: #{nlu_forward.4} parent=0 // loop_pre_header
    _
  $region3: #{nlu_forward.4} parent=0 // loop_header
    %s16 = sphi 0, %s20
    %p17 = scmp.ge.s32.totalorder %s16, 4
    %s26 = sphi 0, %s28
    %s29 = sphi 0, %s26
    %s30 = sphi 0, %s29
    %s46 = sphi 0, %s30
    %s50 = sphi 0, %s50
    %s52 = sphi 0, %s50
    %s53 = sphi 0, %s52
    %s67 = sphi 0, %s53
    %s71 = sphi 0, %s71
    %s73 = sphi 0, %s71
    %s74 = sphi 0, %s73
    %s88 = sphi 0, %s74
    %s92 = sphi 0, %s92
    %s94 = sphi 0, %s92
    %s95 = sphi 0, %s94
    %s109 = sphi 0, %s95
    %s113 = sphi 0, %s113
    %s115 = sphi 0, %s113
    %s116 = sphi 0, %s115
    %s130 = sphi 0, %s116
    %s134 = sphi 0, %s134
    %s136 = sphi 0, %s134
    %s137 = sphi 0, %s136
    %s151 = sphi 0, %s137
    %s155 = sphi 0, %s155
    %s157 = sphi 0, %s155
    %s158 = sphi 0, %s157
    %s172 = sphi 0, %s158
    %s178 = sphi 0, %s180
    %s181 = sphi 0, %s178
    %s182 = sphi 0, %s181
    %s198 = sphi 0, %s182
    %s202 = sphi 0, %s202
    %s204 = sphi 0, %s202
    %s205 = sphi 0, %s204
    %s219 = sphi 0, %s205
    %s223 = sphi 0, %s223
    %s225 = sphi 0, %s223
    %s226 = sphi 0, %s225
    %s240 = sphi 0, %s226
  $region4: #{nlu_forward.4} parent=0 // loop_header_branch
    %19 = sbr.rel (%p17) target = $region8
  $region5: #{nlu_forward.4} parent=0 // loop_body
    %s21 = ssub.s32 %s16, 1
    %s22 = ssub.s32 %s16, 2
    %s23 = sadd.s32 %s16, 1
    %s24 = ssub.s32 %s16, %s23
    %p25 = scmp.eq.s32.totalorder %s24, 0
    %s27 = sadd.s32 %s26, 1
    %s28 = scalar_select %p25, %s26, %s27
    %p31 = pneg %p25
    %p32 = scmp.eq.s32.totalorder %s16, 1
    %p33 = por %p31, %p32
    %p34 = scmp.ne.s32.totalorder %s26, %s29
    %p35 = scmp.eq.s32.totalorder %s16, 0
    %p36 = por %p34, %p35
    %p37 = scmp.ne.s32.totalorder %s26, %s29
    %p38 = scmp.eq.s32.totalorder %s21, 1
    %p39 = por %p37, %p38
    %p40 = scmp.ne.s32.totalorder %s29, %s30
    %p41 = scmp.eq.s32.totalorder %s21, 0
    %p42 = por %p40, %p41
    %p43 = scmp.ne.s32.totalorder %s29, %s30
    %p44 = scmp.eq.s32.totalorder %s22, 1
    %p45 = por %p43, %p44
    %p47 = scmp.ne.s32.totalorder %s30, %s46
    %p48 = scmp.eq.s32.totalorder %s22, 0
    %p49 = por %p47, %p48
    %s51 = sadd.s32 %s50, 1
    %p54 = scmp.eq.s32.totalorder %s16, 1
    %p55 = scmp.ne.s32.totalorder %s50, %s52
    %p56 = scmp.eq.s32.totalorder %s16, 0
    %p57 = por %p55, %p56
    %p58 = scmp.ne.s32.totalorder %s50, %s52
    %p59 = scmp.eq.s32.totalorder %s21, 1
    %p60 = por %p58, %p59
    %p61 = scmp.ne.s32.totalorder %s52, %s53
    %p62 = scmp.eq.s32.totalorder %s21, 0
    %p63 = por %p61, %p62
    %p64 = scmp.ne.s32.totalorder %s52, %s53
    %p65 = scmp.eq.s32.totalorder %s22, 1
    %p66 = por %p64, %p65
    %p68 = scmp.ne.s32.totalorder %s53, %s67
    %p69 = scmp.eq.s32.totalorder %s22, 0
    %p70 = por %p68, %p69
    %s72 = sadd.s32 %s71, 1
    %p75 = scmp.eq.s32.totalorder %s16, 1
    %p76 = scmp.ne.s32.totalorder %s71, %s73
    %p77 = scmp.eq.s32.totalorder %s16, 0
    %p78 = por %p76, %p77
    %p79 = scmp.ne.s32.totalorder %s71, %s73
    %p80 = scmp.eq.s32.totalorder %s21, 1
    %p81 = por %p79, %p80
    %p82 = scmp.ne.s32.totalorder %s73, %s74
    %p83 = scmp.eq.s32.totalorder %s21, 0
    %p84 = por %p82, %p83
    %p85 = scmp.ne.s32.totalorder %s73, %s74
    %p86 = scmp.eq.s32.totalorder %s22, 1
    %p87 = por %p85, %p86
    %p89 = scmp.ne.s32.totalorder %s74, %s88
    %p90 = scmp.eq.s32.totalorder %s22, 0
    %p91 = por %p89, %p90
    %s93 = sadd.s32 %s92, 1
    %p96 = scmp.eq.s32.totalorder %s16, 1
    %p97 = scmp.ne.s32.totalorder %s92, %s94
    %p98 = scmp.eq.s32.totalorder %s16, 0
    %p99 = por %p97, %p98
    %p100 = scmp.ne.s32.totalorder %s92, %s94
    %p101 = scmp.eq.s32.totalorder %s21, 1
    %p102 = por %p100, %p101
    %p103 = scmp.ne.s32.totalorder %s94, %s95
    %p104 = scmp.eq.s32.totalorder %s21, 0
    %p105 = por %p103, %p104
    %p106 = scmp.ne.s32.totalorder %s94, %s95
    %p107 = scmp.eq.s32.totalorder %s22, 1
    %p108 = por %p106, %p107
    %p110 = scmp.ne.s32.totalorder %s95, %s109
    %p111 = scmp.eq.s32.totalorder %s22, 0
    %p112 = por %p110, %p111
    %s114 = sadd.s32 %s113, 1
    %p117 = scmp.eq.s32.totalorder %s16, 1
    %p118 = scmp.ne.s32.totalorder %s113, %s115
    %p119 = scmp.eq.s32.totalorder %s16, 0
    %p120 = por %p118, %p119
    %p121 = scmp.ne.s32.totalorder %s113, %s115
    %p122 = scmp.eq.s32.totalorder %s21, 1
    %p123 = por %p121, %p122
    %p124 = scmp.ne.s32.totalorder %s115, %s116
    %p125 = scmp.eq.s32.totalorder %s21, 0
    %p126 = por %p124, %p125
    %p127 = scmp.ne.s32.totalorder %s115, %s116
    %p128 = scmp.eq.s32.totalorder %s22, 1
    %p129 = por %p127, %p128
    %p131 = scmp.ne.s32.totalorder %s116, %s130
    %p132 = scmp.eq.s32.totalorder %s22, 0
    %p133 = por %p131, %p132
    %s135 = sadd.s32 %s134, 1
    %p138 = scmp.eq.s32.totalorder %s16, 1
    %p139 = scmp.ne.s32.totalorder %s134, %s136
    %p140 = scmp.eq.s32.totalorder %s16, 0
    %p141 = por %p139, %p140
    %p142 = scmp.ne.s32.totalorder %s134, %s136
    %p143 = scmp.eq.s32.totalorder %s21, 1
    %p144 = por %p142, %p143
    %p145 = scmp.ne.s32.totalorder %s136, %s137
    %p146 = scmp.eq.s32.totalorder %s21, 0
    %p147 = por %p145, %p146
    %p148 = scmp.ne.s32.totalorder %s136, %s137
    %p149 = scmp.eq.s32.totalorder %s22, 1
    %p150 = por %p148, %p149
    %p152 = scmp.ne.s32.totalorder %s137, %s151
    %p153 = scmp.eq.s32.totalorder %s22, 0
    %p154 = por %p152, %p153
    %s156 = sadd.s32 %s155, 1
    %p159 = scmp.eq.s32.totalorder %s16, 1
    %p160 = scmp.ne.s32.totalorder %s155, %s157
    %p161 = scmp.eq.s32.totalorder %s16, 0
    %p162 = por %p160, %p161
    %p163 = scmp.ne.s32.totalorder %s155, %s157
    %p164 = scmp.eq.s32.totalorder %s21, 1
    %p165 = por %p163, %p164
    %p166 = scmp.ne.s32.totalorder %s157, %s158
    %p167 = scmp.eq.s32.totalorder %s21, 0
    %p168 = por %p166, %p167
    %p169 = scmp.ne.s32.totalorder %s157, %s158
    %p170 = scmp.eq.s32.totalorder %s22, 1
    %p171 = por %p169, %p170
    %p173 = scmp.ne.s32.totalorder %s158, %s172
    %p174 = scmp.eq.s32.totalorder %s22, 0
    %p175 = por %p173, %p174
    %s176 = ssub.s32 %s16, %s23
    %p177 = scmp.eq.s32.totalorder %s176, 0
    %s179 = sadd.s32 %s178, 1
    %s180 = scalar_select %p177, %s178, %s179
    %p183 = pneg %p177
    %p184 = scmp.eq.s32.totalorder %s16, 1
    %p185 = por %p183, %p184
    %p186 = scmp.ne.s32.totalorder %s178, %s181
    %p187 = scmp.eq.s32.totalorder %s16, 0
    %p188 = por %p186, %p187
    %p189 = scmp.ne.s32.totalorder %s178, %s181
    %p190 = scmp.eq.s32.totalorder %s21, 1
    %p191 = por %p189, %p190
    %p192 = scmp.ne.s32.totalorder %s181, %s182
    %p193 = scmp.eq.s32.totalorder %s21, 0
    %p194 = por %p192, %p193
    %p195 = scmp.ne.s32.totalorder %s181, %s182
    %p196 = scmp.eq.s32.totalorder %s22, 1
    %p197 = por %p195, %p196
    %p199 = scmp.ne.s32.totalorder %s182, %s198
    %p200 = scmp.eq.s32.totalorder %s22, 0
    %p201 = por %p199, %p200
    %s203 = sadd.s32 %s202, 1
    %p206 = scmp.eq.s32.totalorder %s16, 1
    %p207 = scmp.ne.s32.totalorder %s202, %s204
    %p208 = scmp.eq.s32.totalorder %s16, 0
    %p209 = por %p207, %p208
    %p210 = scmp.ne.s32.totalorder %s202, %s204
    %p211 = scmp.eq.s32.totalorder %s21, 1
    %p212 = por %p210, %p211
    %p213 = scmp.ne.s32.totalorder %s204, %s205
    %p214 = scmp.eq.s32.totalorder %s21, 0
    %p215 = por %p213, %p214
    %p216 = scmp.ne.s32.totalorder %s204, %s205
    %p217 = scmp.eq.s32.totalorder %s22, 1
    %p218 = por %p216, %p217
    %p220 = scmp.ne.s32.totalorder %s205, %s219
    %p221 = scmp.eq.s32.totalorder %s22, 0
    %p222 = por %p220, %p221
    %s224 = sadd.s32 %s223, 1
    %p227 = scmp.eq.s32.totalorder %s16, 1
    %p228 = scmp.ne.s32.totalorder %s223, %s225
    %p229 = scmp.eq.s32.totalorder %s16, 0
    %p230 = por %p228, %p229
    %p231 = scmp.ne.s32.totalorder %s223, %s225
    %p232 = scmp.eq.s32.totalorder %s21, 1
    %p233 = por %p231, %p232
    %p234 = scmp.ne.s32.totalorder %s225, %s226
    %p235 = scmp.eq.s32.totalorder %s21, 0
    %p236 = por %p234, %p235
    %p237 = scmp.ne.s32.totalorder %s225, %s226
    %p238 = scmp.eq.s32.totalorder %s22, 1
    %p239 = por %p237, %p238
    %p241 = scmp.ne.s32.totalorder %s226, %s240
    %p242 = scmp.eq.s32.totalorder %s22, 0
    %p243 = por %p241, %p242
    %p244 = scmp.le.s32.totalorder 1, %s16
    %p245 = scmp.lt.s32.totalorder %s16, 3
    %p246 = pnand %p244, %p245
    %p247 = pneg %p246
    // Predicated region
    $region9: #{nlu_forward.4} parent=5 // pred_check
      _
    $region10: #{nlu_forward.4} parent=5 // pred_check_branch
      %249 = sbr.rel (%p246) target = $region12
    $region11: #{nlu_forward.4} parent=5 // pred_region
      %s250 = ssub.s32 %s16, 1
      // Predicated region
      $region13: #{nlu_forward.4} parent=11 // pred_check
        %p251 = pneg %p63
      $region14: #{nlu_forward.4} parent=11 // pred_check_branch
        %253 = sbr.rel (%p251) target = $region16
      $region15: #{nlu_forward.4} parent=11 // pred_region
        _
      $region16: #{nlu_forward.4} parent=11 // pred_fallthru
        _
      // Predicated region
      $region17: #{nlu_forward.4} parent=11 // pred_check
        %p254 = pneg %p84
      $region18: #{nlu_forward.4} parent=11 // pred_check_branch
        %256 = sbr.rel (%p254) target = $region20
      $region19: #{nlu_forward.4} parent=11 // pred_region
        _
      $region20: #{nlu_forward.4} parent=11 // pred_fallthru
        _
      // Predicated region
      $region21: #{nlu_forward.4} parent=11 // pred_check
        %p257 = pneg %p105
      $region22: #{nlu_forward.4} parent=11 // pred_check_branch
        %259 = sbr.rel (%p257) target = $region24
      $region23: #{nlu_forward.4} parent=11 // pred_region
        _
      $region24: #{nlu_forward.4} parent=11 // pred_fallthru
        _
      // Predicated region
      $region25: #{nlu_forward.4} parent=11 // pred_check
        %p260 = pneg %p126
      $region26: #{nlu_forward.4} parent=11 // pred_check_branch
        %262 = sbr.rel (%p260) target = $region28
      $region27: #{nlu_forward.4} parent=11 // pred_region
        _
      $region28: #{nlu_forward.4} parent=11 // pred_fallthru
        _
      // Predicated region
      $region29: #{nlu_forward.4} parent=11 // pred_check
        %p263 = pneg %p147
      $region30: #{nlu_forward.4} parent=11 // pred_check_branch
        %265 = sbr.rel (%p263) target = $region32
      $region31: #{nlu_forward.4} parent=11 // pred_region
        _
      $region32: #{nlu_forward.4} parent=11 // pred_fallthru
        _
      // Predicated region
      $region33: #{nlu_forward.4} parent=11 // pred_check
        %p266 = pneg %p168
      $region34: #{nlu_forward.4} parent=11 // pred_check_branch
        %268 = sbr.rel (%p266) target = $region36
      $region35: #{nlu_forward.4} parent=11 // pred_region
        _
      $region36: #{nlu_forward.4} parent=11 // pred_fallthru
        _
    $region12: #{nlu_forward.4} parent=5 // pred_fallthru
      _
    %p269 = scmp.lt.s32.totalorder %s16, 2
    // Predicated region
    $region37: #{nlu_forward.4} parent=5 // pred_check
      %p270 = pneg %p269
    $region38: #{nlu_forward.4} parent=5 // pred_check_branch
      %272 = sbr.rel (%p270) target = $region40
    $region39: #{nlu_forward.4} parent=5 // pred_region
      // Predicated region
      $region41: #{nlu_forward.4} parent=39 // pred_check
        %p273 = pneg %p36
      $region42: #{nlu_forward.4} parent=39 // pred_check_branch
        %275 = sbr.rel (%p273) target = $region44
      $region43: #{nlu_forward.4} parent=39 // pred_region
        %p276 = scmp.lt.s32.totalorder %s16, 1
        %s277 = scalar_select %p276, %s16, 1
        %s278 = smul.addr %s277, 4
        %s279 = smul.addr %s278, 4
        %s280 = scalar_lea.vmem %s0, %s279
      $region44: #{nlu_forward.4} parent=39 // pred_fallthru
        _
    $region40: #{nlu_forward.4} parent=5 // pred_fallthru
      _
    %p281 = scmp.le.s32.totalorder 1, %s16
    %p282 = scmp.lt.s32.totalorder %s16, 3
    %p283 = pnand %p281, %p282
    %p284 = pneg %p283
    // Predicated region
    $region45: #{nlu_forward.4} parent=5 // pred_check
      _
    $region46: #{nlu_forward.4} parent=5 // pred_check_branch
      %286 = sbr.rel (%p283) target = $region48
    $region47: #{nlu_forward.4} parent=5 // pred_region
      %s287 = ssub.s32 %s16, 1
      %p288 = scmp.lt.s32.totalorder %s21, 1
      %s289 = scalar_select %p288, %s21, 1
      %s290 = smul.addr %s289, 4
      %s291 = smul.addr %s290, 4
      %s292 = scalar_lea.vmem %s0, %s291
      %p293 = pneg %p42
      %p294 = pneg %p39
      %p295 = pneg %p63
      %p296 = pneg %p60
      %p297 = pneg %p84
      %p298 = pneg %p81
      %p299 = pneg %p105
      %p300 = pneg %p102
      %p301 = pneg %p126
      %p302 = pneg %p123
      %p303 = pneg %p147
      %p304 = pneg %p144
      %p305 = pneg %p168
      %p306 = pneg %p165
      %p307 = pneg %p194
      %p308 = pneg %p191
      %p309 = scmp.lt.s32.totalorder %s21, 1
      %s310 = scalar_select %p309, %s21, 1
      %s311 = smul.addr %s310, 3
      %s312 = smul.addr %s311, 4
      %s313 = scalar_lea.vmem %s7, %s312
      %p314 = pneg %p215
      %p315 = pneg %p212
      %p316 = pneg %p236
      %p317 = pneg %p233
      %p318 = scmp.lt.s32.totalorder %s21, 1
      %s319 = scalar_select %p318, %s21, 1
      %s320 = smul.addr %s319, 4
      %s321 = smul.addr %s320, 4
      %s322 = scalar_lea.vmem %s0, %s321
      %p323 = scmp.lt.s32.totalorder %s21, 1
      %s324 = scalar_select %p323, %s21, 1
      %s325 = smul.addr %s324, 3
      %s326 = smul.addr %s325, 4
      %s327 = scalar_lea.vmem %s7, %s326
      %v328 = vld [vmem:[%s322] sm:$0xff]
      %v329 = vld [vmem:[%s322 + $0x8] sm:$0xff]
      %v330 = vunpack.c.l.bf16 %v328
      %v331 = vunpack.c.h.bf16 %v328
      %v332 = vunpack.c.l.bf16 %v329
      %v333 = vunpack.c.h.bf16 %v329
      %338 = vrot.lane.b32.xlu0 %v330, 127
      %v339 = vpop.permute.xlu0 %338
      %340 = vrot.lane.b32.xlu0 %v331, 127
      %v341 = vpop.permute.xlu0 %340
      %342 = vrot.lane.b32.xlu0 %v332, 127
      %v343 = vpop.permute.xlu0 %342
      %344 = vrot.lane.b32.xlu0 %v333, 127
      %v345 = vpop.permute.xlu0 %344
      %vm346 = vcmask 1039360
      %v347 = vsel %vm346, %v339, %v341
      %v348 = vsel %vm346, %v341, %v343
      %v349 = vsel %vm346, %v343, %v345
      %353 = vrot.lane.b32.xlu0 %v330, 126
      %v354 = vpop.permute.xlu0 %353
      %355 = vrot.lane.b32.xlu0 %v331, 126
      %v356 = vpop.permute.xlu0 %355
      %357 = vrot.lane.b32.xlu0 %v332, 126
      %v358 = vpop.permute.xlu0 %357
      %359 = vrot.lane.b32.xlu0 %v333, 126
      %v360 = vpop.permute.xlu0 %359
      %vm361 = vcmask 1031168
      %v362 = vsel %vm361, %v354, %v356
      %v363 = vsel %vm361, %v356, %v358
      %v364 = vsel %vm361, %v358, %v360
      %368 = vrot.lane.b32.xlu0 %v330, 110
      %v369 = vpop.permute.xlu0 %368
      %370 = vrot.lane.b32.xlu0 %v331, 110
      %v371 = vpop.permute.xlu0 %370
      %372 = vrot.lane.b32.xlu0 %v332, 110
      %v373 = vpop.permute.xlu0 %372
      %374 = vrot.lane.b32.xlu0 %v333, 110
      %v375 = vpop.permute.xlu0 %374
      %vm376 = vcmask 900096
      %v377 = vsel %vm376, %v369, %v371
      %v378 = vsel %vm376, %v371, %v373
      %v379 = vsel %vm376, %v373, %v375
      %383 = vrot.lane.b32.xlu0 %v330, 109
      %v384 = vpop.permute.xlu0 %383
      %385 = vrot.lane.b32.xlu0 %v331, 109
      %v386 = vpop.permute.xlu0 %385
      %387 = vrot.lane.b32.xlu0 %v332, 109
      %v388 = vpop.permute.xlu0 %387
      %389 = vrot.lane.b32.xlu0 %v333, 109
      %v390 = vpop.permute.xlu0 %389
      %vm391 = vcmask 891904
      %v392 = vsel %vm391, %v384, %v386
      %v393 = vsel %vm391, %v386, %v388
      %v394 = vsel %vm391, %v388, %v390
      %398 = vrot.lane.b32.xlu0 %v330, 108
      %v399 = vpop.permute.xlu0 %398
      %400 = vrot.lane.b32.xlu0 %v331, 108
      %v401 = vpop.permute.xlu0 %400
      %402 = vrot.lane.b32.xlu0 %v332, 108
      %v403 = vpop.permute.xlu0 %402
      %404 = vrot.lane.b32.xlu0 %v333, 108
      %v405 = vpop.permute.xlu0 %404
      %vm406 = vcmask 883712
      %v407 = vsel %vm406, %v399, %v401
      %v408 = vsel %vm406, %v401, %v403
      %v409 = vsel %vm406, %v403, %v405
      %413 = vrot.lane.b32.xlu0 %v330, 92
      %v414 = vpop.permute.xlu0 %413
      %415 = vrot.lane.b32.xlu0 %v331, 92
      %v416 = vpop.permute.xlu0 %415
      %417 = vrot.lane.b32.xlu0 %v332, 92
      %v418 = vpop.permute.xlu0 %417
      %419 = vrot.lane.b32.xlu0 %v333, 92
      %v420 = vpop.permute.xlu0 %419
      %vm421 = vcmask 752640
      %v422 = vsel %vm421, %v414, %v416
      %v423 = vsel %vm421, %v416, %v418
      %v424 = vsel %vm421, %v418, %v420
      %428 = vrot.lane.b32.xlu0 %v330, 91
      %v429 = vpop.permute.xlu0 %428
      %430 = vrot.lane.b32.xlu0 %v331, 91
      %v431 = vpop.permute.xlu0 %430
      %432 = vrot.lane.b32.xlu0 %v332, 91
      %v433 = vpop.permute.xlu0 %432
      %434 = vrot.lane.b32.xlu0 %v333, 91
      %v435 = vpop.permute.xlu0 %434
      %vm436 = vcmask 744448
      %v437 = vsel %vm436, %v429, %v431
      %v438 = vsel %vm436, %v431, %v433
      %v439 = vsel %vm436, %v433, %v435
      %443 = vrot.lane.b32.xlu0 %v330, 90
      %v444 = vpop.permute.xlu0 %443
      %445 = vrot.lane.b32.xlu0 %v331, 90
      %v446 = vpop.permute.xlu0 %445
      %447 = vrot.lane.b32.xlu0 %v332, 90
      %v448 = vpop.permute.xlu0 %447
      %449 = vrot.lane.b32.xlu0 %v333, 90
      %v450 = vpop.permute.xlu0 %449
      %vm451 = vcmask 736256
      %v452 = vsel %vm451, %v444, %v446
      %v453 = vsel %vm451, %v446, %v448
      %v454 = vsel %vm451, %v448, %v450
      %v458 = vld [vmem:[%s1] sm:$0xff]
      %vm459 = vcmask 588800
      %v461 = vsel %vm459, %v458, 0
      %463 = vmatprep.subr.mxu0 %v331
      %464 = vmatpush1.msra.mxu0 %v330
      %465 = vmatprep.subr.mxu0 %v348
      %466 = vmatpush1.msra.mxu0 %v347
      %467 = vmatprep.subr.mxu0 %v363
      %468 = vmatpush1.msra.mxu0 %v362
      %469 = vmatprep.subr.mxu0 %v378
      %470 = vmatpush1.msra.mxu0 %v377
      %471 = vmatprep.subr.mxu0 %v393
      %472 = vmatpush1.msra.mxu0 %v392
      %473 = vmatprep.subr.mxu0 %v408
      %474 = vmatpush1.msra.mxu0 %v407
      %475 = vmatprep.subr.mxu0 %v423
      %476 = vmatpush1.msra.mxu0 %v422
      %477 = vmatprep.subr.mxu0 %v438
      %478 = vmatpush1.msra.mxu0 %v437
      %479 = vmatprep.subr.mxu0 %v453
      %480 = vmatpush1.msra.mxu0 %v452
      %481 = vmatprep.subr.mxu0 0.0
      %482 = vmatpush1.msra.mxu0 0.0
      %483 = vmatprep.subr.mxu0 0.0
      %484 = vmatpush1.msra.mxu0 0.0
      %485 = vmatprep.subr.mxu0 0.0
      %486 = vmatpush1.msra.mxu0 0.0
      %487 = vmatprep.subr.mxu0 0.0
      %488 = vmatpush1.msra.mxu0 0.0
      %489 = vmatprep.subr.mxu0 0.0
      %490 = vmatpush1.msra.mxu0 0.0
      %491 = vmatprep.subr.mxu0 0.0
      %492 = vmatpush1.msra.mxu0 0.0
      %493 = vmatprep.subr.mxu0 0.0
      %494 = vmatpush1.msra.mxu0 0.0
      %495 = vmatprep.subr.mxu0 0.0
      %496 = vmatpush1.msra.mxu0 0.0
      %497 = vmatprep.subr.mxu0 0.0
      %498 = vmatpush1.msra.mxu0 0.0
      %499 = vmatprep.subr.mxu0 0.0
      %500 = vmatpush1.msra.mxu0 0.0
      %501 = vmatprep.subr.mxu0 0.0
      %502 = vmatpush1.msra.mxu0 0.0
      %503 = vmatprep.subr.mxu0 0.0
      %504 = vmatpush1.msra.mxu0 0.0
      %505 = vmatprep.subr.mxu0 0.0
      %506 = vmatpush1.msra.mxu0 0.0
      %507 = vmatprep.subr.mxu0 0.0
      %508 = vmatpush1.msra.mxu0 0.0
      %509 = vmatprep.subr.mxu0 0.0
      %510 = vmatpush1.msra.mxu0 0.0
      %511 = vmatprep.subr.mxu0 0.0
      %512 = vmatpush1.msra.mxu0 0.0
      %513 = vmatprep.subr.mxu0 0.0
      %514 = vmatpush1.msra.mxu0 0.0
      %515 = vmatprep.subr.mxu0 0.0
      %516 = vmatpush1.msra.mxu0 0.0
      %517 = vmatprep.subr.mxu0 0.0
      %518 = vmatpush1.msra.mxu0 0.0
      %519 = vmatprep.subr.mxu0 0.0
      %520 = vmatpush1.msra.mxu0 0.0
      %521 = vmatprep.subr.mxu0 0.0
      %522 = vmatpush1.msra.mxu0 0.0
      %523 = vmatprep.subr.mxu0 0.0
      %524 = vmatpush1.msra.mxu0 0.0
      %525 = vmatprep.subr.mxu0 0.0
      %526 = vmatpush1.msra.mxu0 0.0
      %527 = vmatprep.mubr.f32.mxu0 0.0
      %528 = vmatmul.mubr.f32.gmra.mrb[0].mxu0 %v461
      %v529 = vpop.f32.mrb[0].mxu0
      %v530 = vadd.f32 0.0, %v529
      %v531 = vpop.f32.mrb[0].mxu0
      %v532 = vadd.f32 0.0, %v531
      %533 = vdwg.mxu0
      %534 = vmatprep.subr.mxu0 0.0
      %535 = vmatpush1.msra.mxu0 %v332
      %536 = vmatprep.subr.mxu0 0.0
      %537 = vmatpush1.msra.mxu0 %v349
      %538 = vmatprep.subr.mxu0 0.0
      %539 = vmatpush1.msra.mxu0 %v364
      %540 = vmatprep.subr.mxu0 0.0
      %541 = vmatpush1.msra.mxu0 %v379
      %542 = vmatprep.subr.mxu0 0.0
      %543 = vmatpush1.msra.mxu0 %v394
      %544 = vmatprep.subr.mxu0 0.0
      %545 = vmatpush1.msra.mxu0 %v409
      %546 = vmatprep.subr.mxu0 0.0
      %547 = vmatpush1.msra.mxu0 %v424
      %548 = vmatprep.subr.mxu0 0.0
      %549 = vmatpush1.msra.mxu0 %v439
      %550 = vmatprep.subr.mxu0 0.0
      %551 = vmatpush1.msra.mxu0 %v454
      %552 = vmatprep.subr.mxu0 0.0
      %553 = vmatpush1.msra.mxu0 0.0
      %554 = vmatprep.subr.mxu0 0.0
      %555 = vmatpush1.msra.mxu0 0.0
      %556 = vmatprep.subr.mxu0 0.0
      %557 = vmatpush1.msra.mxu0 0.0
      %558 = vmatprep.subr.mxu0 0.0
      %559 = vmatpush1.msra.mxu0 0.0
      %560 = vmatprep.subr.mxu0 0.0
      %561 = vmatpush1.msra.mxu0 0.0
      %562 = vmatprep.subr.mxu0 0.0
      %563 = vmatpush1.msra.mxu0 0.0
      %564 = vmatprep.subr.mxu0 0.0
      %565 = vmatpush1.msra.mxu0 0.0
      %566 = vmatprep.subr.mxu0 0.0
      %567 = vmatpush1.msra.mxu0 0.0
      %568 = vmatprep.subr.mxu0 0.0
      %569 = vmatpush1.msra.mxu0 0.0
      %570 = vmatprep.subr.mxu0 0.0
      %571 = vmatpush1.msra.mxu0 0.0
      %572 = vmatprep.subr.mxu0 0.0
      %573 = vmatpush1.msra.mxu0 0.0
      %574 = vmatprep.subr.mxu0 0.0
      %575 = vmatpush1.msra.mxu0 0.0
      %576 = vmatprep.subr.mxu0 0.0
      %577 = vmatpush1.msra.mxu0 0.0
      %578 = vmatprep.subr.mxu0 0.0
      %579 = vmatpush1.msra.mxu0 0.0
      %580 = vmatprep.subr.mxu0 0.0
      %581 = vmatpush1.msra.mxu0 0.0
      %582 = vmatprep.subr.mxu0 0.0
      %583 = vmatpush1.msra.mxu0 0.0
      %584 = vmatprep.subr.mxu0 0.0
      %585 = vmatpush1.msra.mxu0 0.0
      %586 = vmatprep.subr.mxu0 0.0
      %587 = vmatpush1.msra.mxu0 0.0
      %588 = vmatprep.subr.mxu0 0.0
      %589 = vmatpush1.msra.mxu0 0.0
      %590 = vmatprep.subr.mxu0 0.0
      %591 = vmatpush1.msra.mxu0 0.0
      %592 = vmatprep.subr.mxu0 0.0
      %593 = vmatpush1.msra.mxu0 0.0
      %594 = vmatprep.subr.mxu0 0.0
      %595 = vmatpush1.msra.mxu0 0.0
      %596 = vmatprep.subr.mxu0 0.0
      %597 = vmatpush1.msra.mxu0 0.0
      %598 = vmatprep.mubr.f32.mxu0 0.0
      %599 = vmatmul.mubr.f32.gmra.mrb[0].mxu0 %v461
      %v600 = vpop.f32.mrb[0].mxu0
      %v601 = vadd.f32 0.0, %v600
      %v602 = vpop.f32.mrb[0].mxu0
      %603 = vdwg.mxu0
      %v604 = vld [vmem:[%s2] sm:$0xff]
      %606 = vset.pattern.permute.xlu0 0
      %607 = vperm.xlu0 %606, %v604
      %v608 = vpop.permute.xlu0 %607
      %v610 = vmul.f32 %v530, %v608
      %v611 = vmul.f32 %v532, %v608
      %v612 = vmul.f32 %v601, %v608
      %v613 = vld [vmem:[%s3] sm:$0xff]
      %615 = vset.pattern.permute.xlu0 0
      %616 = vperm.xlu0 %615, %v613
      %v617 = vpop.permute.xlu0 %616
      %v619 = vadd.f32 %v610, %v617
      %v620 = vadd.f32 %v611, %v617
      %v621 = vadd.f32 %v612, %v617
      %vm622 = vcmp.gt.f32.partialorder %v619, 0.0
      %vm623 = vcmp.gt.f32.partialorder %v620, 0.0
      %vm624 = vcmp.gt.f32.partialorder %v621, 0.0
      %v625 = vmul.f32 %v619, 0.01
      %v626 = vmul.f32 %v620, 0.01
      %v627 = vmul.f32 %v621, 0.01
      %v628 = vsel %vm622, %v619, %v625
      %v629 = vsel %vm623, %v620, %v626
      %v630 = vsel %vm624, %v621, %v627
      %v631 = vld [vmem:[%s5] sm:$0x7]
      %v633 = vlaneseq
      %v634 = vshrl.u32 %v633, 7
      %v635 = vsub.s32 0, %v634
      %v636 = vrot.slane %v631, %v635
      %v637 = vlaneseq
      %v638 = vshrl.u32 %v637, 7
      %v639 = vsub.s32 1, %v638
      %v640 = vrot.slane %v631, %v639
      %v641 = vlaneseq
      %v642 = vshrl.u32 %v641, 7
      %v643 = vsub.s32 2, %v642
      %v644 = vrot.slane %v631, %v643
      %v648 = vmul.f32 %v628, %v636
      %v649 = vmul.f32 %v629, %v640
      %v650 = vmul.f32 %v630, %v644
      %v651 = vpack.c.bf16 %v648, %v648
      %v652 = vpack.c.bf16 %v649, %v649
      %v653 = vpack.c.bf16 %v650, %v650
      %v657 = vunpack.c.l.b16 %v651
      %v658 = vunpack.c.l.b16 %v652
      %v659 = vunpack.c.l.b16 %v653
      %v660 = vpack.c.b16 %v658, %v657
      %v661 = vpack.c.b16 %v659, %v659
      %664 = vst [vmem:[%s327] sm:$0xff] %v660
      %665 = vst [vmem:[%s327 + $0x8] sm:$0xf] %v661
      %v666 = vunpack.c.l.bf16 %v651
      %v667 = vunpack.c.l.bf16 %v652
      %v668 = vunpack.c.l.bf16 %v653
      %672 = vrot.lane.b32.xlu0 %v666, 127
      %v673 = vpop.permute.xlu0 %672
      %674 = vrot.lane.b32.xlu0 %v667, 127
      %v675 = vpop.permute.xlu0 %674
      %676 = vrot.lane.b32.xlu0 %v668, 127
      %v677 = vpop.permute.xlu0 %676
      %v678 = vsel %vm346, %v673, %v675
      %v679 = vsel %vm346, %v675, %v677
      %683 = vrot.lane.b32.xlu0 %v666, 126
      %v684 = vpop.permute.xlu0 %683
      %685 = vrot.lane.b32.xlu0 %v667, 126
      %v686 = vpop.permute.xlu0 %685
      %687 = vrot.lane.b32.xlu0 %v668, 126
      %v688 = vpop.permute.xlu0 %687
      %v689 = vsel %vm361, %v684, %v686
      %v690 = vsel %vm361, %v686, %v688
      %694 = vrot.lane.b32.xlu0 %v666, 110
      %v695 = vpop.permute.xlu0 %694
      %696 = vrot.lane.b32.xlu0 %v667, 110
      %v697 = vpop.permute.xlu0 %696
      %698 = vrot.lane.b32.xlu0 %v668, 110
      %v699 = vpop.permute.xlu0 %698
      %v700 = vsel %vm376, %v695, %v697
      %v701 = vsel %vm376, %v697, %v699
      %705 = vrot.lane.b32.xlu0 %v666, 109
      %v706 = vpop.permute.xlu0 %705
      %707 = vrot.lane.b32.xlu0 %v667, 109
      %v708 = vpop.permute.xlu0 %707
      %709 = vrot.lane.b32.xlu0 %v668, 109
      %v710 = vpop.permute.xlu0 %709
      %v711 = vsel %vm391, %v706, %v708
      %v712 = vsel %vm391, %v708, %v710
      %716 = vrot.lane.b32.xlu0 %v666, 108
      %v717 = vpop.permute.xlu0 %716
      %718 = vrot.lane.b32.xlu0 %v667, 108
      %v719 = vpop.permute.xlu0 %718
      %720 = vrot.lane.b32.xlu0 %v668, 108
      %v721 = vpop.permute.xlu0 %720
      %v722 = vsel %vm406, %v717, %v719
      %v723 = vsel %vm406, %v719, %v721
      %727 = vrot.lane.b32.xlu0 %v666, 92
      %v728 = vpop.permute.xlu0 %727
      %729 = vrot.lane.b32.xlu0 %v667, 92
      %v730 = vpop.permute.xlu0 %729
      %731 = vrot.lane.b32.xlu0 %v668, 92
      %v732 = vpop.permute.xlu0 %731
      %v733 = vsel %vm421, %v728, %v730
      %v734 = vsel %vm421, %v730, %v732
      %738 = vrot.lane.b32.xlu0 %v666, 91
      %v739 = vpop.permute.xlu0 %738
      %740 = vrot.lane.b32.xlu0 %v667, 91
      %v741 = vpop.permute.xlu0 %740
      %742 = vrot.lane.b32.xlu0 %v668, 91
      %v743 = vpop.permute.xlu0 %742
      %v744 = vsel %vm436, %v739, %v741
      %v745 = vsel %vm436, %v741, %v743
      %749 = vrot.lane.b32.xlu0 %v666, 90
      %v750 = vpop.permute.xlu0 %749
      %751 = vrot.lane.b32.xlu0 %v667, 90
      %v752 = vpop.permute.xlu0 %751
      %753 = vrot.lane.b32.xlu0 %v668, 90
      %v754 = vpop.permute.xlu0 %753
      %v755 = vsel %vm451, %v750, %v752
      %v756 = vsel %vm451, %v752, %v754
      %v760 = vld [vmem:[%s4] sm:$0xff]
      %v762 = vsel %vm459, %v760, 0
      %764 = vmatprep.subr.mxu0 %v667
      %765 = vmatpush1.msra.mxu0 %v666
      %766 = vmatprep.subr.mxu0 %v679
      %767 = vmatpush1.msra.mxu0 %v678
      %768 = vmatprep.subr.mxu0 %v690
      %769 = vmatpush1.msra.mxu0 %v689
      %770 = vmatprep.subr.mxu0 %v701
      %771 = vmatpush1.msra.mxu0 %v700
      %772 = vmatprep.subr.mxu0 %v712
      %773 = vmatpush1.msra.mxu0 %v711
      %774 = vmatprep.subr.mxu0 %v723
      %775 = vmatpush1.msra.mxu0 %v722
      %776 = vmatprep.subr.mxu0 %v734
      %777 = vmatpush1.msra.mxu0 %v733
      %778 = vmatprep.subr.mxu0 %v745
      %779 = vmatpush1.msra.mxu0 %v744
      %780 = vmatprep.subr.mxu0 %v756
      %781 = vmatpush1.msra.mxu0 %v755
      %782 = vmatprep.subr.mxu0 0.0
      %783 = vmatpush1.msra.mxu0 0.0
      %784 = vmatprep.subr.mxu0 0.0
      %785 = vmatpush1.msra.mxu0 0.0
      %786 = vmatprep.subr.mxu0 0.0
      %787 = vmatpush1.msra.mxu0 0.0
      %788 = vmatprep.subr.mxu0 0.0
      %789 = vmatpush1.msra.mxu0 0.0
      %790 = vmatprep.subr.mxu0 0.0
      %791 = vmatpush1.msra.mxu0 0.0
      %792 = vmatprep.subr.mxu0 0.0
      %793 = vmatpush1.msra.mxu0 0.0
      %794 = vmatprep.subr.mxu0 0.0
      %795 = vmatpush1.msra.mxu0 0.0
      %796 = vmatprep.subr.mxu0 0.0
      %797 = vmatpush1.msra.mxu0 0.0
      %798 = vmatprep.subr.mxu0 0.0
      %799 = vmatpush1.msra.mxu0 0.0
      %800 = vmatprep.subr.mxu0 0.0
      %801 = vmatpush1.msra.mxu0 0.0
      %802 = vmatprep.subr.mxu0 0.0
      %803 = vmatpush1.msra.mxu0 0.0
      %804 = vmatprep.subr.mxu0 0.0
      %805 = vmatpush1.msra.mxu0 0.0
      %806 = vmatprep.subr.mxu0 0.0
      %807 = vmatpush1.msra.mxu0 0.0
      %808 = vmatprep.subr.mxu0 0.0
      %809 = vmatpush1.msra.mxu0 0.0
      %810 = vmatprep.subr.mxu0 0.0
      %811 = vmatpush1.msra.mxu0 0.0
      %812 = vmatprep.subr.mxu0 0.0
      %813 = vmatpush1.msra.mxu0 0.0
      %814 = vmatprep.subr.mxu0 0.0
      %815 = vmatpush1.msra.mxu0 0.0
      %816 = vmatprep.subr.mxu0 0.0
      %817 = vmatpush1.msra.mxu0 0.0
      %818 = vmatprep.subr.mxu0 0.0
      %819 = vmatpush1.msra.mxu0 0.0
      %820 = vmatprep.subr.mxu0 0.0
      %821 = vmatpush1.msra.mxu0 0.0
      %822 = vmatprep.subr.mxu0 0.0
      %823 = vmatpush1.msra.mxu0 0.0
      %824 = vmatprep.subr.mxu0 0.0
      %825 = vmatpush1.msra.mxu0 0.0
      %826 = vmatprep.subr.mxu0 0.0
      %827 = vmatpush1.msra.mxu0 0.0
      %828 = vmatprep.mubr.f32.mxu0 0.0
      %829 = vmatmul.mubr.f32.gmra.mrb[0].mxu0 %v762
      %v830 = vpop.f32.mrb[0].mxu0
      %v831 = vadd.f32 0.0, %v830
      %v832 = vpop.f32.mrb[0].mxu0
      %v833 = vadd.f32 0.0, %v832
      %834 = vdwg.mxu0
      %835 = vmatprep.subr.mxu0 0.0
      %836 = vmatpush1.msra.mxu0 %v668
      %837 = vmatprep.subr.mxu0 0.0
      %838 = vmatpush1.msra.mxu0 %v677
      %839 = vmatprep.subr.mxu0 0.0
      %840 = vmatpush1.msra.mxu0 %v688
      %841 = vmatprep.subr.mxu0 0.0
      %842 = vmatpush1.msra.mxu0 %v699
      %843 = vmatprep.subr.mxu0 0.0
      %844 = vmatpush1.msra.mxu0 %v710
      %845 = vmatprep.subr.mxu0 0.0
      %846 = vmatpush1.msra.mxu0 %v721
      %847 = vmatprep.subr.mxu0 0.0
      %848 = vmatpush1.msra.mxu0 %v732
      %849 = vmatprep.subr.mxu0 0.0
      %850 = vmatpush1.msra.mxu0 %v743
      %851 = vmatprep.subr.mxu0 0.0
      %852 = vmatpush1.msra.mxu0 %v754
      %853 = vmatprep.subr.mxu0 0.0
      %854 = vmatpush1.msra.mxu0 0.0
      %855 = vmatprep.subr.mxu0 0.0
      %856 = vmatpush1.msra.mxu0 0.0
      %857 = vmatprep.subr.mxu0 0.0
      %858 = vmatpush1.msra.mxu0 0.0
      %859 = vmatprep.subr.mxu0 0.0
      %860 = vmatpush1.msra.mxu0 0.0
      %861 = vmatprep.subr.mxu0 0.0
      %862 = vmatpush1.msra.mxu0 0.0
      %863 = vmatprep.subr.mxu0 0.0
      %864 = vmatpush1.msra.mxu0 0.0
      %865 = vmatprep.subr.mxu0 0.0
      %866 = vmatpush1.msra.mxu0 0.0
      %867 = vmatprep.subr.mxu0 0.0
      %868 = vmatpush1.msra.mxu0 0.0
      %869 = vmatprep.subr.mxu0 0.0
      %870 = vmatpush1.msra.mxu0 0.0
      %871 = vmatprep.subr.mxu0 0.0
      %872 = vmatpush1.msra.mxu0 0.0
      %873 = vmatprep.subr.mxu0 0.0
      %874 = vmatpush1.msra.mxu0 0.0
      %875 = vmatprep.subr.mxu0 0.0
      %876 = vmatpush1.msra.mxu0 0.0
      %877 = vmatprep.subr.mxu0 0.0
      %878 = vmatpush1.msra.mxu0 0.0
      %879 = vmatprep.subr.mxu0 0.0
      %880 = vmatpush1.msra.mxu0 0.0
      %881 = vmatprep.subr.mxu0 0.0
      %882 = vmatpush1.msra.mxu0 0.0
      %883 = vmatprep.subr.mxu0 0.0
      %884 = vmatpush1.msra.mxu0 0.0
      %885 = vmatprep.subr.mxu0 0.0
      %886 = vmatpush1.msra.mxu0 0.0
      %887 = vmatprep.subr.mxu0 0.0
      %888 = vmatpush1.msra.mxu0 0.0
      %889 = vmatprep.subr.mxu0 0.0
      %890 = vmatpush1.msra.mxu0 0.0
      %891 = vmatprep.subr.mxu0 0.0
      %892 = vmatpush1.msra.mxu0 0.0
      %893 = vmatprep.subr.mxu0 0.0
      %894 = vmatpush1.msra.mxu0 0.0
      %895 = vmatprep.subr.mxu0 0.0
      %896 = vmatpush1.msra.mxu0 0.0
      %897 = vmatprep.subr.mxu0 0.0
      %898 = vmatpush1.msra.mxu0 0.0
      %899 = vmatprep.mubr.f32.mxu0 0.0
      %900 = vmatmul.mubr.f32.gmra.mrb[0].mxu0 %v762
      %v901 = vpop.f32.mrb[0].mxu0
      %v902 = vadd.f32 0.0, %v901
      %v903 = vpop.f32.mrb[0].mxu0
      %904 = vdwg.mxu0
      %v905 = vld [vmem:[%s6] sm:$0x7]
      %v907 = vlaneseq
      %v908 = vshrl.u32 %v907, 7
      %v909 = vsub.s32 0, %v908
      %v910 = vrot.slane %v905, %v909
      %v911 = vlaneseq
      %v912 = vshrl.u32 %v911, 7
      %v913 = vsub.s32 1, %v912
      %v914 = vrot.slane %v905, %v913
      %v915 = vlaneseq
      %v916 = vshrl.u32 %v915, 7
      %v917 = vsub.s32 2, %v916
      %v918 = vrot.slane %v905, %v917
      %v922 = vmul.f32 %v831, %v910
      %v923 = vmul.f32 %v833, %v914
      %v924 = vmul.f32 %v902, %v918
      %p925 = scmp.eq.s32.totalorder %s21, 0
      // Predicated region
      $region49: #{nlu_forward.4} parent=47 // pred_check
        %p926 = pneg %p925
      $region50: #{nlu_forward.4} parent=47 // pred_check_branch
        %928 = sbr.rel (%p926) target = $region52
      $region51: #{nlu_forward.4} parent=47 // pred_region
        %vm929 = vcmask 7168
        %930 = vst.msk [vmem:[%s8] sm:$0xff] %vm929, 0.0
        %931 = vst.msk [vmem:[%s9] sm:$0xff] %vm929, 0.0
      $region52: #{nlu_forward.4} parent=47 // pred_fallthru
        _
      %v932 = vld [vmem:[%s8] sm:$0xff]
      %v933 = vadd.f32 %v922, %v923
      %vm934 = vcmask 556032
      %v935 = vsel %vm934, %v924, 0.0
      %v936 = vadd.f32 %v933, %v935
      %937 = vadd.xlane.f32.xlu0 %v936
      %v938 = vpop.xlane.xlu0 %937
      %v939 = vadd.f32 %v932, %v938
      %vm940 = vcmask 7168
      %941 = vst.msk [vmem:[%s8] sm:$0xff] %vm940, %v939
      %v942 = vld [vmem:[%s9] sm:$0xff]
      %v943 = vmul.f32 %v922, %v922
      %v944 = vmul.f32 %v923, %v923
      %v945 = vmul.f32 %v924, %v924
      %v946 = vadd.f32 %v943, %v944
      %v947 = vsel %vm934, %v945, 0.0
      %v948 = vadd.f32 %v946, %v947
      %949 = vadd.xlane.f32.xlu0 %v948
      %v950 = vpop.xlane.xlu0 %949
      %v951 = vadd.f32 %v942, %v950
      %952 = vst.msk [vmem:[%s9] sm:$0xff] %vm940, %v951
      %p953 = scmp.lt.s32.totalorder %s21, 1
      %s954 = scalar_select %p953, %s21, 1
      %s955 = smul.addr %s954, 3
      %s956 = smul.addr %s955, 4
      %s957 = scalar_lea.vmem %s7, %s956
      // Predicated region
      $region53: #{nlu_forward.4} parent=47 // pred_check
        %p958 = pneg %p191
      $region54: #{nlu_forward.4} parent=47 // pred_check_branch
        %960 = sbr.rel (%p958) target = $region56
      $region55: #{nlu_forward.4} parent=47 // pred_region
        _
      $region56: #{nlu_forward.4} parent=47 // pred_fallthru
        _
      // Predicated region
      $region57: #{nlu_forward.4} parent=47 // pred_check
        %p961 = pneg %p212
      $region58: #{nlu_forward.4} parent=47 // pred_check_branch
        %963 = sbr.rel (%p961) target = $region60
      $region59: #{nlu_forward.4} parent=47 // pred_region
        _
      $region60: #{nlu_forward.4} parent=47 // pred_fallthru
        _
      // Predicated region
      $region61: #{nlu_forward.4} parent=47 // pred_check
        %p964 = pneg %p233
      $region62: #{nlu_forward.4} parent=47 // pred_check_branch
        %966 = sbr.rel (%p964) target = $region64
      $region63: #{nlu_forward.4} parent=47 // pred_region
        _
      $region64: #{nlu_forward.4} parent=47 // pred_fallthru
        _
      // Predicated region
      $region65: #{nlu_forward.4} parent=47 // pred_check
        %p967 = pneg %p212
      $region66: #{nlu_forward.4} parent=47 // pred_check_branch
        %969 = sbr.rel (%p967) target = $region68
      $region67: #{nlu_forward.4} parent=47 // pred_region
        _
      $region68: #{nlu_forward.4} parent=47 // pred_fallthru
        _
      // Predicated region
      $region69: #{nlu_forward.4} parent=47 // pred_check
        %p970 = pneg %p233
      $region70: #{nlu_forward.4} parent=47 // pred_check_branch
        %972 = sbr.rel (%p970) target = $region72
      $region71: #{nlu_forward.4} parent=47 // pred_region
        _
      $region72: #{nlu_forward.4} parent=47 // pred_fallthru
        _
    $region48: #{nlu_forward.4} parent=5 // pred_fallthru
      _
    %p973 = scmp.le.s32.totalorder 2, %s16
    // Predicated region
    $region73: #{nlu_forward.4} parent=5 // pred_check
      %p974 = pneg %p973
    $region74: #{nlu_forward.4} parent=5 // pred_check_branch
      %976 = sbr.rel (%p974) target = $region76
    $region75: #{nlu_forward.4} parent=5 // pred_region
      %s977 = ssub.s32 %s16, 2
      // Predicated region
      $region77: #{nlu_forward.4} parent=75 // pred_check
        %p978 = pneg %p197
      $region78: #{nlu_forward.4} parent=75 // pred_check_branch
        %980 = sbr.rel (%p978) target = $region80
      $region79: #{nlu_forward.4} parent=75 // pred_region
        %p981 = scmp.lt.s32.totalorder %s22, 1
        %s982 = scalar_select %p981, %s22, 1
        %s983 = smul.addr %s982, 3
        %s984 = smul.addr %s983, 4
        %s985 = scalar_lea.vmem %s7, %s984
      $region80: #{nlu_forward.4} parent=75 // pred_fallthru
        _
    $region76: #{nlu_forward.4} parent=5 // pred_fallthru
      _
  $region6: #{nlu_forward.4} parent=0 // loop_footer
    %s20 = sadd.s32 1, %s16
  $region7: #{nlu_forward.4} parent=0 // loop_footer_branch
    %15 = sbr.rel target = $region3
  $region8: #{nlu_forward.4} parent=0 // loop_exit
    _

</llo_original>
